<compile_context>
chip_gen: v5e
topology: v5e:2x2
jax: 0.10.0
libtpu: 0.0.40
codegen_flags: <defaults>
</compile_context>

<pallas_src>
import functools

import jax
import jax.numpy as jnp
from jax.experimental import pallas as pl
from jax.experimental.pallas import tpu as pltpu


def _round_up(x, m):
    return ((x + m - 1) // m) * m


def _mse_weight_kernel(pred_ref, target_ref, w_ref, out_ref, loss_acc, num_acc,
                       *, n_rows):
    h = pl.program_id(1)

    @pl.when(h == 0)
    def _():
        loss_acc[...] = jnp.zeros_like(loss_acc)
        num_acc[...] = jnp.zeros_like(num_acc)

    pred = pred_ref[...].astype(jnp.float32)
    target = target_ref[...].astype(jnp.float32)
    th, tw = pred_ref.shape

    valid = target != -100.0
    if n_rows % th != 0:
        # Ragged last H tile: out-of-range rows of the block hold garbage (not
        # -100), so mask them explicitly against the true row count.
        row = jax.lax.broadcasted_iota(jnp.int32, (th, tw), 0) + h * th
        valid = jnp.logical_and(valid, row < n_rows)

    diff = pred - target
    sq = jnp.where(valid, diff * diff, 0.0)
    msk = valid.astype(jnp.float32)

    # Fold TILE_H rows into 8 sublanes with VPU adds (sublane-group compatible
    # reshape, no relayout); defer the single cross-sublane XLU reduction to
    # the finalize step.
    loss_acc[...] += sq.reshape(th // 8, 8, tw).sum(axis=0)
    num_acc[...] += msk.reshape(th // 8, 8, tw).sum(axis=0)

    @pl.when(h == pl.num_programs(1) - 1)
    def _():
        loss_sum = jnp.sum(loss_acc[...], axis=0, keepdims=True)  # (1, TILE_W)
        num_sum = jnp.sum(num_acc[...], axis=0, keepdims=True)    # (1, TILE_W)
        w = w_ref[...].astype(jnp.float32)                        # (1, TILE_W)
        # Weight applied once per column (it distributes over the row sum).
        # Fully masked columns -> 0/0 -> NaN, matching torch semantics.
        out_ref[...] = w * loss_sum * pl.reciprocal(num_sum, approx=False)


def _pick_tiles(H, W):
    """Per-generation tile sizes + explicit scoped-VMEM limit."""
    kind = ""
    try:
        kind = jax.devices()[0].device_kind.lower()
    except Exception:
        pass
    if "v7" in kind or "tpu7" in kind:
        tile_h, vmem, n_cores = 2048, 40 << 20, 2
    elif "v6" in kind:
        tile_h, vmem, n_cores = 1024, 32 << 20, 1
    else:  # v5e / unknown: conservative tiles, but above the 16 MiB v5e default.
        tile_h, vmem, n_cores = 512, 24 << 20, 1

    tile_h = min(tile_h, _round_up(H, 16))   # multiple of 16 (clean bf16 packing)
    tile_w = min(512, _round_up(W, 128))
    # v7x: megacore shards only the "parallel" (W) grid axis -- make sure there
    # are at least 2 W tiles so both TensorCores stream HBM.
    if n_cores > 1 and W > 128 and pl.cdiv(W, tile_w) < n_cores:
        tile_w = max(128, _round_up(-(-W // n_cores), 128))
    return tile_h, tile_w, vmem


@functools.partial(jax.jit, static_argnames=("tile_h", "tile_w", "vmem_limit"))
def _per_label_loss_pallas(pred, target, weights, *, tile_h, tile_w, vmem_limit):
    H, W = pred.shape
    n_w = pl.cdiv(W, tile_w)
    n_h = pl.cdiv(H, tile_h)

    w2d = weights.astype(jnp.float32).reshape(1, W)

    bytes_in = (pred.size * pred.dtype.itemsize
                + target.size * target.dtype.itemsize
                + W * 4)
    cost = pl.CostEstimate(flops=5 * H * W, transcendentals=0,
                           bytes_accessed=bytes_in + W * 4)

    kernel = functools.partial(_mse_weight_kernel, n_rows=H)

    per_label = pl.pallas_call(
        kernel,
        out_shape=jax.ShapeDtypeStruct((1, W), jnp.float32),
        grid_spec=pltpu.PrefetchScalarGridSpec(
            num_scalar_prefetch=0,
            grid=(n_w, n_h),
            in_specs=[
                pl.BlockSpec((tile_h, tile_w), lambda j, h: (h, j)),
                pl.BlockSpec((tile_h, tile_w), lambda j, h: (h, j)),
                pl.BlockSpec((1, tile_w), lambda j, h: (0, j)),
            ],
            out_specs=pl.BlockSpec((1, tile_w), lambda j, h: (0, j)),
            scratch_shapes=[
                pltpu.VMEM((8, tile_w), jnp.float32),
                pltpu.VMEM((8, tile_w), jnp.float32),
            ],
        ),
        compiler_params=pltpu.CompilerParams(
            dimension_semantics=("parallel", "arbitrary"),
            vmem_limit_bytes=vmem_limit,
        ),
        cost_estimate=cost,
    )(pred, target, w2d)

    return per_label.reshape(W)


@jax.jit
def _per_label_loss_ref(pred, target, weights):
    """Plain-JAX path for tiny problems (kernel-launch overhead dominates)."""
    p = pred.astype(jnp.float32)
    t = target.astype(jnp.float32)
    mask = (t != -100.0).astype(jnp.float32)
    loss = jnp.sum((p - t) ** 2 * mask * weights[None, :].astype(jnp.float32), axis=0)
    num = jnp.sum(mask, axis=0)
    return loss / num


_SMALL_PROBLEM_ELEMS = 100_000


def custom_mse_loss_weight(pred, target, weights, train_labels_idx):
    """pred, target: (H, W); weights: (W,) or None; returns per-label loss
    gathered at train_labels_idx (the gather is plain JAX glue, like the
    PyTorch fancy indexing)."""
    pred = jnp.asarray(pred)
    target = jnp.asarray(target)
    H, W = pred.shape
    if weights is None:
        weights = jnp.ones((W,), jnp.float32)
    else:
        weights = jnp.asarray(weights, dtype=jnp.float32)

    if H * W < _SMALL_PROBLEM_ELEMS:
        per_label = _per_label_loss_ref(pred, target, weights)
    else:
        tile_h, tile_w, vmem = _pick_tiles(H, W)
        per_label = _per_label_loss_pallas(
            pred, target, weights, tile_h=tile_h, tile_w=tile_w, vmem_limit=vmem
        )

    idx = jnp.asarray(train_labels_idx, dtype=jnp.int32)
    return per_label[idx]


if __name__ == "__main__":
    key = jax.random.PRNGKey(0)

    def make_case(k, H, W, mask_p=0.25):
        kp, kt, km = jax.random.split(k, 3)
        pred = jax.random.normal(kp, (H, W), dtype=jnp.float32)
        target = jax.random.normal(kt, (H, W), dtype=jnp.float32)
        drop = jax.random.bernoulli(km, p=mask_p, shape=(H, W))
        target = jnp.where(drop, jnp.full_like(target, -100.0), target)
        weights = jnp.linspace(0.5, 1.5, W, dtype=jnp.float32)
        return pred, target, weights

    def reference(pred, target, weights, idx):
        mask = (target != -100.0).astype(jnp.float32)
        loss = jnp.sum((pred - target) ** 2 * mask * weights[None, :], axis=0)
        num = jnp.sum(mask, axis=0)
        return (loss / num)[jnp.asarray(idx)]

    k1, k2 = jax.random.split(key)

    # Case 1: Pallas path (ragged in both H and W, no wrapper-side padding).
    H1, W1 = 777, 300
    pred1, target1, w1 = make_case(k1, H1, W1)
    train_idx1 = list(range(W1))[1::7]
    out1 = jax.block_until_ready(custom_mse_loss_weight(pred1, target1, w1, train_idx1))
    ref1 = reference(pred1, target1, w1, train_idx1)
    assert jnp.allclose(out1, ref1, rtol=1e-5, atol=1e-5), (out1, ref1)

    # Case 2: tiny problem -> plain-JAX fallback path (same module semantics).
    H2, W2 = 8, 16
    pred2, target2, w2 = make_case(k2, H2, W2)
    labels2 = [f"lab{i}" for i in range(W2)]
    train_labels2 = ["lab1", "lab3", "lab5", "lab7"]
    train_idx2 = [labels2.index(i) for i in train_labels2]
    out2 = jax.block_until_ready(custom_mse_loss_weight(pred2, target2, w2, train_idx2))
    ref2 = reference(pred2, target2, w2, train_idx2)
    assert jnp.allclose(out2, ref2, rtol=1e-5, atol=1e-5), (out2, ref2)

    print("KERNEL_OK")
</pallas_src>

<mosaic_0001>
module attributes {stable_mosaic.version = 11 : i64} {
  func.func @_mse_weight_kernel(%arg0: i32, %arg1: i32, %arg2: memref<512x384xf32, #tpu.memory_space<vmem>>, %arg3: memref<512x384xf32, #tpu.memory_space<vmem>>, %arg4: memref<1x384xf32, #tpu.memory_space<vmem>>, %arg5: memref<1x384xf32, #tpu.memory_space<vmem>>, %arg6: memref<8x384xf32, #tpu.memory_space<vmem>>, %arg7: memref<8x384xf32, #tpu.memory_space<vmem>>) attributes {dimension_semantics = [#tpu.dimension_semantics<parallel>, #tpu.dimension_semantics<arbitrary>], iteration_bounds = array<i64: 1, 2>, scalar_prefetch = 0 : i64, scratch_operands = 2 : i64, tpu.core_type = #tpu.core_type<tc>, window_params = [{transform_indices = @transform_0, window_bounds = array<i64: 512, 384>}, {transform_indices = @transform_1, window_bounds = array<i64: 512, 384>}, {transform_indices = @transform_2, window_bounds = array<i64: 1, 384>}, {transform_indices = @transform_3, window_bounds = array<i64: 1, 384>}]} {
    %c0_i32 = arith.constant 0 : i32
    %0 = arith.cmpi eq, %arg1, %c0_i32 : i32
    %1 = arith.extui %0 : i1 to i32
    %c0_i32_0 = arith.constant 0 : i32
    %2 = arith.cmpi ne, %1, %c0_i32_0 : i32
    scf.if %2 {
      %cst_16 = arith.constant 0.000000e+00 : f32
      %33 = vector.broadcast %cst_16 : f32 to vector<8x384xf32>
      %c0_17 = arith.constant 0 : index
      %c0_18 = arith.constant 0 : index
      %34 = vector.load %arg6[%c0_17, %c0_18] : memref<8x384xf32, #tpu.memory_space<vmem>>, vector<8x384xf32>
      tpu.vector_store %arg6[%c0_17, %c0_18], %33 {strides = array<i32>} : memref<8x384xf32, #tpu.memory_space<vmem>>, vector<8x384xf32>,
      %cst_19 = arith.constant 0.000000e+00 : f32
      %35 = vector.broadcast %cst_19 : f32 to vector<8x384xf32>
      %c0_20 = arith.constant 0 : index
      %c0_21 = arith.constant 0 : index
      %36 = vector.load %arg7[%c0_20, %c0_21] : memref<8x384xf32, #tpu.memory_space<vmem>>, vector<8x384xf32>
      tpu.vector_store %arg7[%c0_20, %c0_21], %35 {strides = array<i32>} : memref<8x384xf32, #tpu.memory_space<vmem>>, vector<8x384xf32>,
    } else {
    }
    %c0 = arith.constant 0 : index
    %c0_1 = arith.constant 0 : index
    %3 = vector.load %arg2[%c0, %c0_1] : memref<512x384xf32, #tpu.memory_space<vmem>>, vector<512x384xf32>
    %c0_2 = arith.constant 0 : index
    %c0_3 = arith.constant 0 : index
    %4 = vector.load %arg3[%c0_2, %c0_3] : memref<512x384xf32, #tpu.memory_space<vmem>>, vector<512x384xf32>
    %cst = arith.constant -1.000000e+02 : f32
    %5 = vector.broadcast %cst : f32 to vector<512x384xf32>
    %6 = arith.cmpf one, %4, %5 : vector<512x384xf32>
    %7 = tpu.iota {dimensions = array<i32: 0>} : vector<512x384xi32>
    %c512_i32 = arith.constant 512 : i32
    %8 = arith.muli %arg1, %c512_i32 : i32
    %9 = vector.broadcast %8 : i32 to vector<512x384xi32>
    %10 = arith.addi %7, %9 : vector<512x384xi32>
    %c777_i32 = arith.constant 777 : i32
    %11 = vector.broadcast %c777_i32 : i32 to vector<512x384xi32>
    %12 = arith.cmpi slt, %10, %11 : vector<512x384xi32>
    %13 = arith.andi %6, %12 : vector<512x384xi1>
    %14 = arith.subf %3, %4 : vector<512x384xf32>
    %15 = arith.mulf %14, %14 : vector<512x384xf32>
    %cst_4 = arith.constant 0.000000e+00 : f32
    %16 = vector.broadcast %cst_4 : f32 to vector<512x384xf32>
    %17 = arith.select %13, %15, %16 : vector<512x384xi1>, vector<512x384xf32>
    %18 = arith.extui %13 : vector<512x384xi1> to vector<512x384xi32>
    %19 = arith.sitofp %18 : vector<512x384xi32> to vector<512x384xf32>
    %c0_5 = arith.constant 0 : index
    %c0_6 = arith.constant 0 : index
    %20 = vector.load %arg6[%c0_5, %c0_6] : memref<8x384xf32, #tpu.memory_space<vmem>>, vector<8x384xf32>
    %21 = vector.shape_cast %17 : vector<512x384xf32> to vector<64x8x384xf32>
    %cst_7 = arith.constant dense<0.000000e+00> : vector<8x384xf32>
    %22 = vector.multi_reduction <add>, %21, %cst_7 [0] : vector<64x8x384xf32> to vector<8x384xf32>
    %23 = arith.addf %20, %22 : vector<8x384xf32>
    %c0_8 = arith.constant 0 : index
    %c0_9 = arith.constant 0 : index
    %24 = vector.load %arg6[%c0_8, %c0_9] : memref<8x384xf32, #tpu.memory_space<vmem>>, vector<8x384xf32>
    tpu.vector_store %arg6[%c0_8, %c0_9], %23 {strides = array<i32>} : memref<8x384xf32, #tpu.memory_space<vmem>>, vector<8x384xf32>,
    %c0_10 = arith.constant 0 : index
    %c0_11 = arith.constant 0 : index
    %25 = vector.load %arg7[%c0_10, %c0_11] : memref<8x384xf32, #tpu.memory_space<vmem>>, vector<8x384xf32>
    %26 = vector.shape_cast %19 : vector<512x384xf32> to vector<64x8x384xf32>
    %cst_12 = arith.constant dense<0.000000e+00> : vector<8x384xf32>
    %27 = vector.multi_reduction <add>, %26, %cst_12 [0] : vector<64x8x384xf32> to vector<8x384xf32>
    %28 = arith.addf %25, %27 : vector<8x384xf32>
    %c0_13 = arith.constant 0 : index
    %c0_14 = arith.constant 0 : index
    %29 = vector.load %arg7[%c0_13, %c0_14] : memref<8x384xf32, #tpu.memory_space<vmem>>, vector<8x384xf32>
    tpu.vector_store %arg7[%c0_13, %c0_14], %28 {strides = array<i32>} : memref<8x384xf32, #tpu.memory_space<vmem>>, vector<8x384xf32>,
    %c1_i32 = arith.constant 1 : i32
    %30 = arith.cmpi eq, %arg1, %c1_i32 : i32
    %31 = arith.extui %30 : i1 to i32
    %c0_i32_15 = arith.constant 0 : i32
    %32 = arith.cmpi ne, %31, %c0_i32_15 : i32
    scf.if %32 {
      %c0_16 = arith.constant 0 : index
      %c0_17 = arith.constant 0 : index
      %33 = vector.load %arg6[%c0_16, %c0_17] : memref<8x384xf32, #tpu.memory_space<vmem>>, vector<8x384xf32>
      %cst_18 = arith.constant dense<0.000000e+00> : vector<384xf32>
      %34 = vector.multi_reduction <add>, %33, %cst_18 [0] : vector<8x384xf32> to vector<384xf32>
      %35 = vector.shape_cast %34 : vector<384xf32> to vector<1x384xf32>
      %c0_19 = arith.constant 0 : index
      %c0_20 = arith.constant 0 : index
      %36 = vector.load %arg7[%c0_19, %c0_20] : memref<8x384xf32, #tpu.memory_space<vmem>>, vector<8x384xf32>
      %cst_21 = arith.constant dense<0.000000e+00> : vector<384xf32>
      %37 = vector.multi_reduction <add>, %36, %cst_21 [0] : vector<8x384xf32> to vector<384xf32>
      %38 = vector.shape_cast %37 : vector<384xf32> to vector<1x384xf32>
      %c0_22 = arith.constant 0 : index
      %c0_23 = arith.constant 0 : index
      %39 = vector.load %arg4[%c0_22, %c0_23] : memref<1x384xf32, #tpu.memory_space<vmem>>, vector<1x384xf32>
      %40 = arith.mulf %39, %35 : vector<1x384xf32>
      %41 = tpu.reciprocal %38 : vector<1x384xf32> -> vector<1x384xf32>
      %42 = arith.mulf %40, %41 : vector<1x384xf32>
      %c0_24 = arith.constant 0 : index
      %c0_25 = arith.constant 0 : index
      %43 = vector.load %arg5[%c0_24, %c0_25] : memref<1x384xf32, #tpu.memory_space<vmem>>, vector<1x384xf32>
      tpu.vector_store %arg5[%c0_24, %c0_25], %42 {strides = array<i32>} : memref<1x384xf32, #tpu.memory_space<vmem>>, vector<1x384xf32>,
    } else {
    }
    return
  }
  func.func @transform_0(%arg0: i32, %arg1: i32) -> (i32, i32) {
    %c0_i32 = arith.constant 0 : i32
    return %arg1, %arg0 : i32, i32
  }
  func.func @transform_1(%arg0: i32, %arg1: i32) -> (i32, i32) {
    %c0_i32 = arith.constant 0 : i32
    return %arg1, %arg0 : i32, i32
  }
  func.func @transform_2(%arg0: i32, %arg1: i32) -> (i32, i32) {
    %c0_i32 = arith.constant 0 : i32
    %c0_i32_0 = arith.constant 0 : i32
    return %c0_i32, %arg0 : i32, i32
  }
  func.func @transform_3(%arg0: i32, %arg1: i32) -> (i32, i32) {
    %c0_i32 = arith.constant 0 : i32
    %c0_i32_0 = arith.constant 0 : i32
    return %c0_i32, %arg0 : i32, i32
  }
}

</mosaic_0001>

<llo_original>
// kernel: _per_label_loss_pallas.1
$region0: #{_per_label_loss_pallas.1}
  #allocation0 [shape = 'u32[]', space=smem, size = 0x4, offset = 0x4, fixed_abs, tag = 'smem constant byte address 0x4 - core index']
  #allocation1 [shape = 'u32[72,128]{1,0:T(1,128)}', space=vmem, size = 0x9000, scoped, tag = 'internal scratch']
  #allocation2 [shape = 'f32[8,384]{1,0:T(8,128)}', space=vmem, size = 0x3000, scoped, tag = 'scratch operand']
  #allocation3 [shape = 'f32[8,384]{1,0:T(8,128)}', space=vmem, size = 0x3000, scoped, tag = 'scratch operand']
  %s0 = inlined_call_operand.vmem [shape: f32[777,300], index: 0, kind: input, shape index: {}]
  %s1 = inlined_call_operand.vmem [shape: f32[777,300], index: 1, kind: input, shape index: {}]
  %s2 = inlined_call_operand.vmem [shape: f32[1,300], index: 2, kind: input, shape index: {}]
  %s3 = inlined_call_operand.vmem [shape: f32[1,300], index: 3, kind: output, shape index: {}]
  %s4 = sld [smem:[#allocation0]]
  $region53: #{_per_label_loss_pallas.1} parent=0
    _
  %s6 = ssub.s32 1, %s4
  %s7 = scalar_select 0, %s6, %s4
  loop: start=0, step=1, limit=4
  $region2: #{_per_label_loss_pallas.1} parent=0 // loop_pre_header
    _
  $region3: #{_per_label_loss_pallas.1} parent=0 // loop_header
    %s9 = sphi 0, %s13
    %p10 = scmp.ge.s32.totalorder %s9, 4
    %s16 = sphi 0, %s28
    %s17 = sphi 0, %s24
    %s18 = sphi 0, %s16
    %s19 = sphi 0, %s17
    %s20 = sphi 0, %s18
    %s21 = sphi 0, %s19
    %s33 = sphi 0, %s35
    %s36 = sphi 0, %s33
    %s37 = sphi 0, %s36
    %s53 = sphi 0, %s37
    %s61 = sphi 0, %s63
    %s64 = sphi 0, %s61
    %s65 = sphi 0, %s64
    %s81 = sphi 0, %s65
    %s87 = sphi 0, %s89
    %s90 = sphi 0, %s87
    %s91 = sphi 0, %s90
    %s107 = sphi 0, %s91
    %s113 = sphi 0, %s115
    %s116 = sphi 0, %s113
    %s117 = sphi 0, %s116
    %s133 = sphi 0, %s117
  $region4: #{_per_label_loss_pallas.1} parent=0 // loop_header_branch
    %12 = sbr.rel (%p10) target = $region8
  $region5: #{_per_label_loss_pallas.1} parent=0 // loop_body
    %s14 = ssub.s32 %s9, 1
    %s15 = ssub.s32 %s9, 2
    %s22 = sadd.s32 1, %s17
    %p23 = scmp.ge.s32.totalorder %s22, 2
    %s24 = scalar_select %p23, 0, %s22
    %s25 = sadd.s32 1, %s16
    %s26 = scalar_select %p23, %s25, %s16
    %p27 = scmp.ge.s32.totalorder %s26, 1
    %s28 = scalar_select %p27, 0, %s26
    %s29 = ssub.s32 %s17, %s24
    %s30 = ssub.s32 %s16, %s28
    %s31 = sor.u32 %s29, %s30
    %p32 = scmp.eq.s32.totalorder %s31, 0
    %s34 = sadd.s32 %s33, 1
    %s35 = scalar_select %p32, %s33, %s34
    %p38 = pneg %p32
    %p39 = scmp.eq.s32.totalorder %s9, 1
    %p40 = por %p38, %p39
    %p41 = scmp.ne.s32.totalorder %s33, %s36
    %p42 = scmp.eq.s32.totalorder %s9, 0
    %p43 = por %p41, %p42
    %p44 = scmp.ne.s32.totalorder %s33, %s36
    %p45 = scmp.eq.s32.totalorder %s14, 1
    %p46 = por %p44, %p45
    %p47 = scmp.ne.s32.totalorder %s36, %s37
    %p48 = scmp.eq.s32.totalorder %s14, 0
    %p49 = por %p47, %p48
    %p50 = scmp.ne.s32.totalorder %s36, %s37
    %p51 = scmp.eq.s32.totalorder %s15, 1
    %p52 = por %p50, %p51
    %p54 = scmp.ne.s32.totalorder %s37, %s53
    %p55 = scmp.eq.s32.totalorder %s15, 0
    %p56 = por %p54, %p55
    %s57 = ssub.s32 %s17, %s24
    %s58 = ssub.s32 %s16, %s28
    %s59 = sor.u32 %s57, %s58
    %p60 = scmp.eq.s32.totalorder %s59, 0
    %s62 = sadd.s32 %s61, 1
    %s63 = scalar_select %p60, %s61, %s62
    %p66 = pneg %p60
    %p67 = scmp.eq.s32.totalorder %s9, 1
    %p68 = por %p66, %p67
    %p69 = scmp.ne.s32.totalorder %s61, %s64
    %p70 = scmp.eq.s32.totalorder %s9, 0
    %p71 = por %p69, %p70
    %p72 = scmp.ne.s32.totalorder %s61, %s64
    %p73 = scmp.eq.s32.totalorder %s14, 1
    %p74 = por %p72, %p73
    %p75 = scmp.ne.s32.totalorder %s64, %s65
    %p76 = scmp.eq.s32.totalorder %s14, 0
    %p77 = por %p75, %p76
    %p78 = scmp.ne.s32.totalorder %s64, %s65
    %p79 = scmp.eq.s32.totalorder %s15, 1
    %p80 = por %p78, %p79
    %p82 = scmp.ne.s32.totalorder %s65, %s81
    %p83 = scmp.eq.s32.totalorder %s15, 0
    %p84 = por %p82, %p83
    %s85 = ssub.s32 %s16, %s28
    %p86 = scmp.eq.s32.totalorder %s85, 0
    %s88 = sadd.s32 %s87, 1
    %s89 = scalar_select %p86, %s87, %s88
    %p92 = pneg %p86
    %p93 = scmp.eq.s32.totalorder %s9, 1
    %p94 = por %p92, %p93
    %p95 = scmp.ne.s32.totalorder %s87, %s90
    %p96 = scmp.eq.s32.totalorder %s9, 0
    %p97 = por %p95, %p96
    %p98 = scmp.ne.s32.totalorder %s87, %s90
    %p99 = scmp.eq.s32.totalorder %s14, 1
    %p100 = por %p98, %p99
    %p101 = scmp.ne.s32.totalorder %s90, %s91
    %p102 = scmp.eq.s32.totalorder %s14, 0
    %p103 = por %p101, %p102
    %p104 = scmp.ne.s32.totalorder %s90, %s91
    %p105 = scmp.eq.s32.totalorder %s15, 1
    %p106 = por %p104, %p105
    %p108 = scmp.ne.s32.totalorder %s91, %s107
    %p109 = scmp.eq.s32.totalorder %s15, 0
    %p110 = por %p108, %p109
    %s111 = ssub.s32 %s16, %s28
    %p112 = scmp.eq.s32.totalorder %s111, 0
    %s114 = sadd.s32 %s113, 1
    %s115 = scalar_select %p112, %s113, %s114
    %p118 = pneg %p112
    %p119 = scmp.eq.s32.totalorder %s9, 1
    %p120 = por %p118, %p119
    %p121 = scmp.ne.s32.totalorder %s113, %s116
    %p122 = scmp.eq.s32.totalorder %s9, 0
    %p123 = por %p121, %p122
    %p124 = scmp.ne.s32.totalorder %s113, %s116
    %p125 = scmp.eq.s32.totalorder %s14, 1
    %p126 = por %p124, %p125
    %p127 = scmp.ne.s32.totalorder %s116, %s117
    %p128 = scmp.eq.s32.totalorder %s14, 0
    %p129 = por %p127, %p128
    %p130 = scmp.ne.s32.totalorder %s116, %s117
    %p131 = scmp.eq.s32.totalorder %s15, 1
    %p132 = por %p130, %p131
    %p134 = scmp.ne.s32.totalorder %s117, %s133
    %p135 = scmp.eq.s32.totalorder %s15, 0
    %p136 = por %p134, %p135
    %p137 = scmp.le.s32.totalorder 1, %s9
    %p138 = scmp.lt.s32.totalorder %s9, 3
    %p139 = pnand %p137, %p138
    %p140 = pneg %p139
    // Predicated region
    $region9: #{_per_label_loss_pallas.1} parent=5 // pred_check
      _
    $region10: #{_per_label_loss_pallas.1} parent=5 // pred_check_branch
      %142 = sbr.rel (%p139) target = $region12
    $region11: #{_per_label_loss_pallas.1} parent=5 // pred_region
      %s143 = ssub.s32 %s9, 1
      // Predicated region
      $region13: #{_per_label_loss_pallas.1} parent=11 // pred_check
        %p144 = pneg %p103
      $region14: #{_per_label_loss_pallas.1} parent=11 // pred_check_branch
        %146 = sbr.rel (%p144) target = $region16
      $region15: #{_per_label_loss_pallas.1} parent=11 // pred_region
        %s147 = smul.u32 3, %s18
        %p148 = scmp.lt.s32.totalorder %s147, 2
        %s149 = scalar_select %p148, %s147, 2
        %s150 = scalar_lea.vmem %s2, %s149
        %s151 = smul.u32 3, %s18
      $region16: #{_per_label_loss_pallas.1} parent=11 // pred_fallthru
        _
    $region12: #{_per_label_loss_pallas.1} parent=5 // pred_fallthru
      _
    %p152 = scmp.lt.s32.totalorder %s9, 2
    // Predicated region
    $region17: #{_per_label_loss_pallas.1} parent=5 // pred_check
      %p153 = pneg %p152
    $region18: #{_per_label_loss_pallas.1} parent=5 // pred_check_branch
      %155 = sbr.rel (%p153) target = $region20
    $region19: #{_per_label_loss_pallas.1} parent=5 // pred_region
      // Predicated region
      $region21: #{_per_label_loss_pallas.1} parent=19 // pred_check
        %p156 = pneg %p43
      $region22: #{_per_label_loss_pallas.1} parent=19 // pred_check_branch
        %158 = sbr.rel (%p156) target = $region24
      $region23: #{_per_label_loss_pallas.1} parent=19 // pred_region
        %s159 = smul.u32 64, %s17
        %s160 = smul.u32 3, %s16
        %s161 = ssub.s32 98, %s159
        %p162 = scmp.lt.s32.totalorder %s161, 64
        %s163 = scalar_select %p162, %s161, 64
        %s164 = smul.u32 8, %s163
        %s165 = smul.u32 %s164, 3
        %p166 = scmp.lt.s32.totalorder %s159, 97
        %s167 = scalar_select %p166, %s159, 97
        %p168 = scmp.lt.s32.totalorder %s160, 2
        %s169 = scalar_select %p168, %s160, 2
        %s170 = smul.addr %s167, 3
        %s171 = sadd.s32 %s169, %s170
        %s172 = smul.addr %s171, 8
        %s173 = scalar_lea.vmem %s0, %s172
        %s174 = smul.u32 64, %s17
        %s175 = smul.u32 3, %s16
        %s176 = ssub.s32 98, %s174
        %p177 = scmp.lt.s32.totalorder %s176, 64
        %s178 = scalar_select %p177, %s176, 64
        %s179 = smul.u32 8, %s178
        %s180 = smul.u32 %s179, 3
      $region24: #{_per_label_loss_pallas.1} parent=19 // pred_fallthru
        _
      // Predicated region
      $region25: #{_per_label_loss_pallas.1} parent=19 // pred_check
        %p181 = pneg %p71
      $region26: #{_per_label_loss_pallas.1} parent=19 // pred_check_branch
        %183 = sbr.rel (%p181) target = $region28
      $region27: #{_per_label_loss_pallas.1} parent=19 // pred_region
        %s184 = smul.u32 64, %s17
        %s185 = smul.u32 3, %s16
        %s186 = ssub.s32 98, %s184
        %p187 = scmp.lt.s32.totalorder %s186, 64
        %s188 = scalar_select %p187, %s186, 64
        %s189 = smul.u32 8, %s188
        %s190 = smul.u32 %s189, 3
        %p191 = scmp.lt.s32.totalorder %s184, 97
        %s192 = scalar_select %p191, %s184, 97
        %p193 = scmp.lt.s32.totalorder %s185, 2
        %s194 = scalar_select %p193, %s185, 2
        %s195 = smul.addr %s192, 3
        %s196 = sadd.s32 %s194, %s195
        %s197 = smul.addr %s196, 8
        %s198 = scalar_lea.vmem %s1, %s197
        %s199 = smul.u32 64, %s17
        %s200 = smul.u32 3, %s16
        %s201 = ssub.s32 98, %s199
        %p202 = scmp.lt.s32.totalorder %s201, 64
        %s203 = scalar_select %p202, %s201, 64
        %s204 = smul.u32 8, %s203
        %s205 = smul.u32 %s204, 3
      $region28: #{_per_label_loss_pallas.1} parent=19 // pred_fallthru
        _
    $region20: #{_per_label_loss_pallas.1} parent=5 // pred_fallthru
      _
    %p206 = scmp.le.s32.totalorder 1, %s9
    %p207 = scmp.lt.s32.totalorder %s9, 3
    %p208 = pnand %p206, %p207
    %p209 = pneg %p208
    // Predicated region
    $region29: #{_per_label_loss_pallas.1} parent=5 // pred_check
      _
    $region30: #{_per_label_loss_pallas.1} parent=5 // pred_check_branch
      %211 = sbr.rel (%p208) target = $region32
    $region31: #{_per_label_loss_pallas.1} parent=5 // pred_region
      %s212 = ssub.s32 %s9, 1
      %s213 = smul.u32 64, %s19
      %s214 = smul.u32 3, %s18
      %s215 = ssub.s32 98, %s213
      %p216 = scmp.lt.s32.totalorder %s215, 64
      %s217 = scalar_select %p216, %s215, 64
      %s218 = smul.u32 8, %s217
      %s219 = smul.u32 %s218, 3
      %p220 = scmp.lt.s32.totalorder %s213, 97
      %s221 = scalar_select %p220, %s213, 97
      %p222 = scmp.lt.s32.totalorder %s214, 2
      %s223 = scalar_select %p222, %s214, 2
      %s224 = smul.addr %s221, 3
      %s225 = sadd.s32 %s223, %s224
      %s226 = smul.addr %s225, 8
      %s227 = scalar_lea.vmem %s0, %s226
      %p228 = pneg %p49
      %p229 = pneg %p46
      %s230 = smul.u32 64, %s19
      %s231 = smul.u32 3, %s18
      %s232 = ssub.s32 98, %s230
      %p233 = scmp.lt.s32.totalorder %s232, 64
      %s234 = scalar_select %p233, %s232, 64
      %s235 = smul.u32 8, %s234
      %s236 = smul.u32 %s235, 3
      %p237 = scmp.lt.s32.totalorder %s230, 97
      %s238 = scalar_select %p237, %s230, 97
      %p239 = scmp.lt.s32.totalorder %s231, 2
      %s240 = scalar_select %p239, %s231, 2
      %s241 = smul.addr %s238, 3
      %s242 = sadd.s32 %s240, %s241
      %s243 = smul.addr %s242, 8
      %s244 = scalar_lea.vmem %s1, %s243
      %p245 = pneg %p77
      %p246 = pneg %p74
      %s247 = smul.u32 3, %s18
      %p248 = scmp.lt.s32.totalorder %s247, 2
      %s249 = scalar_select %p248, %s247, 2
      %s250 = scalar_lea.vmem %s2, %s249
      %p251 = pneg %p103
      %p252 = pneg %p100
      %p253 = pneg %p129
      %p254 = pneg %p126
      %s255 = smul.u32 3, %s18
      %p256 = scmp.lt.s32.totalorder %s255, 2
      %s257 = scalar_select %p256, %s255, 2
      %s258 = scalar_lea.vmem %s3, %s257
      %s259 = smul.u32 64, %s19
      %s260 = smul.u32 3, %s18
      %s261 = ssub.s32 98, %s259
      %p262 = scmp.lt.s32.totalorder %s261, 64
      %s263 = scalar_select %p262, %s261, 64
      %s264 = smul.u32 8, %s263
      %s265 = smul.u32 %s264, 3
      %p266 = scmp.lt.s32.totalorder %s259, 97
      %s267 = scalar_select %p266, %s259, 97
      %p268 = scmp.lt.s32.totalorder %s260, 2
      %s269 = scalar_select %p268, %s260, 2
      %s270 = smul.addr %s267, 3
      %s271 = sadd.s32 %s269, %s270
      %s272 = smul.addr %s271, 8
      %s273 = scalar_lea.vmem %s0, %s272
      %s274 = smul.u32 64, %s19
      %s275 = smul.u32 3, %s18
      %s276 = ssub.s32 98, %s274
      %p277 = scmp.lt.s32.totalorder %s276, 64
      %s278 = scalar_select %p277, %s276, 64
      %s279 = smul.u32 8, %s278
      %s280 = smul.u32 %s279, 3
      %s281 = smul.u32 64, %s19
      %s282 = smul.u32 3, %s18
      %s283 = ssub.s32 98, %s281
      %p284 = scmp.lt.s32.totalorder %s283, 64
      %s285 = scalar_select %p284, %s283, 64
      %s286 = smul.u32 8, %s285
      %s287 = smul.u32 %s286, 3
      %p288 = scmp.lt.s32.totalorder %s281, 97
      %s289 = scalar_select %p288, %s281, 97
      %p290 = scmp.lt.s32.totalorder %s282, 2
      %s291 = scalar_select %p290, %s282, 2
      %s292 = smul.addr %s289, 3
      %s293 = sadd.s32 %s291, %s292
      %s294 = smul.addr %s293, 8
      %s295 = scalar_lea.vmem %s1, %s294
      %s296 = smul.u32 64, %s19
      %s297 = smul.u32 3, %s18
      %s298 = ssub.s32 98, %s296
      %p299 = scmp.lt.s32.totalorder %s298, 64
      %s300 = scalar_select %p299, %s298, 64
      %s301 = smul.u32 8, %s300
      %s302 = smul.u32 %s301, 3
      %s303 = smul.u32 3, %s18
      %p304 = scmp.lt.s32.totalorder %s303, 2
      %s305 = scalar_select %p304, %s303, 2
      %s306 = scalar_lea.vmem %s2, %s305
      %s307 = smul.u32 3, %s18
      %s308 = smul.u32 3, %s18
      %p309 = scmp.lt.s32.totalorder %s308, 2
      %s310 = scalar_select %p309, %s308, 2
      %s311 = scalar_lea.vmem %s3, %s310
      %s312 = smul.u32 3, %s18
      %p313 = scmp.eq.s32.totalorder %s19, 0
      // Predicated region
      $region33: #{_per_label_loss_pallas.1} parent=31 // pred_check
        %p314 = pneg %p313
      $region34: #{_per_label_loss_pallas.1} parent=31 // pred_check_branch
        %316 = sbr.rel (%p314) target = $region36
      $region35: #{_per_label_loss_pallas.1} parent=31 // pred_region
        %317 = vst [vmem:[#allocation2] sm:$0xff] 0.0
        %318 = vst [vmem:[#allocation2 + $0x8] sm:$0xff] 0.0
        %319 = vst [vmem:[#allocation2 + $0x10] sm:$0xff] 0.0
        %320 = vst [vmem:[#allocation3] sm:$0xff] 0.0
        %321 = vst [vmem:[#allocation3 + $0x8] sm:$0xff] 0.0
        %322 = vst [vmem:[#allocation3 + $0x10] sm:$0xff] 0.0
      $region36: #{_per_label_loss_pallas.1} parent=31 // pred_fallthru
        _
      %v323 = vld [vmem:[%s273] sm:$0xff]
      %v324 = vld [vmem:[%s273 + $0x8] sm:$0xff]
      %v325 = vld [vmem:[%s273 + $0x10] sm:$0xff]
      %v326 = vld [vmem:[%s273 + $0x18] sm:$0xff]
      %v327 = vld [vmem:[%s273 + $0x20] sm:$0xff]
      %v328 = vld [vmem:[%s273 + $0x28] sm:$0xff]
      %v329 = vld [vmem:[%s273 + $0x30] sm:$0xff]
      %v330 = vld [vmem:[%s273 + $0x38] sm:$0xff]
      %v331 = vld [vmem:[%s273 + $0x40] sm:$0xff]
      %v332 = vld [vmem:[%s273 + $0x48] sm:$0xff]
      %v333 = vld [vmem:[%s273 + $0x50] sm:$0xff]
      %v334 = vld [vmem:[%s273 + $0x58] sm:$0xff]
      %v335 = vld [vmem:[%s273 + $0x60] sm:$0xff]
      %v336 = vld [vmem:[%s273 + $0x68] sm:$0xff]
      %v337 = vld [vmem:[%s273 + $0x70] sm:$0xff]
      %v338 = vld [vmem:[%s273 + $0x78] sm:$0xff]
      %v339 = vld [vmem:[%s273 + $0x80] sm:$0xff]
      %v340 = vld [vmem:[%s273 + $0x88] sm:$0xff]
      %v341 = vld [vmem:[%s273 + $0x90] sm:$0xff]
      %v342 = vld [vmem:[%s273 + $0x98] sm:$0xff]
      %v343 = vld [vmem:[%s273 + $0xa0] sm:$0xff]
      %v344 = vld [vmem:[%s273 + $0xa8] sm:$0xff]
      %v345 = vld [vmem:[%s273 + $0xb0] sm:$0xff]
      %v346 = vld [vmem:[%s273 + $0xb8] sm:$0xff]
      %v347 = vld [vmem:[%s273 + $0xc0] sm:$0xff]
      %v348 = vld [vmem:[%s273 + $0xc8] sm:$0xff]
      %v349 = vld [vmem:[%s273 + $0xd0] sm:$0xff]
      %v350 = vld [vmem:[%s273 + $0xd8] sm:$0xff]
      %v351 = vld [vmem:[%s273 + $0xe0] sm:$0xff]
      %v352 = vld [vmem:[%s273 + $0xe8] sm:$0xff]
      %v353 = vld [vmem:[%s273 + $0xf0] sm:$0xff]
      %v354 = vld [vmem:[%s273 + $0xf8] sm:$0xff]
      %v355 = vld [vmem:[%s273 + $0x100] sm:$0xff]
      %v356 = vld [vmem:[%s273 + $0x108] sm:$0xff]
      %v357 = vld [vmem:[%s273 + $0x110] sm:$0xff]
      %v358 = vld [vmem:[%s273 + $0x118] sm:$0xff]
      %v359 = vld [vmem:[%s273 + $0x120] sm:$0xff]
      %v360 = vld [vmem:[%s273 + $0x128] sm:$0xff]
      %v361 = vld [vmem:[%s273 + $0x130] sm:$0xff]
      %v362 = vld [vmem:[%s273 + $0x138] sm:$0xff]
      %v363 = vld [vmem:[%s273 + $0x140] sm:$0xff]
      %v364 = vld [vmem:[%s273 + $0x148] sm:$0xff]
      %v365 = vld [vmem:[%s273 + $0x150] sm:$0xff]
      %v366 = vld [vmem:[%s273 + $0x158] sm:$0xff]
      %v367 = vld [vmem:[%s273 + $0x160] sm:$0xff]
      %v368 = vld [vmem:[%s273 + $0x168] sm:$0xff]
      %v369 = vld [vmem:[%s273 + $0x170] sm:$0xff]
      %v370 = vld [vmem:[%s273 + $0x178] sm:$0xff]
      %v371 = vld [vmem:[%s273 + $0x180] sm:$0xff]
      %v372 = vld [vmem:[%s273 + $0x188] sm:$0xff]
      %v373 = vld [vmem:[%s273 + $0x190] sm:$0xff]
      %v374 = vld [vmem:[%s273 + $0x198] sm:$0xff]
      %v375 = vld [vmem:[%s273 + $0x1a0] sm:$0xff]
      %v376 = vld [vmem:[%s273 + $0x1a8] sm:$0xff]
      %v377 = vld [vmem:[%s273 + $0x1b0] sm:$0xff]
      %v378 = vld [vmem:[%s273 + $0x1b8] sm:$0xff]
      %v379 = vld [vmem:[%s273 + $0x1c0] sm:$0xff]
      %v380 = vld [vmem:[%s273 + $0x1c8] sm:$0xff]
      %v381 = vld [vmem:[%s273 + $0x1d0] sm:$0xff]
      %v382 = vld [vmem:[%s273 + $0x1d8] sm:$0xff]
      %v383 = vld [vmem:[%s273 + $0x1e0] sm:$0xff]
      %v384 = vld [vmem:[%s273 + $0x1e8] sm:$0xff]
      %v385 = vld [vmem:[%s273 + $0x1f0] sm:$0xff]
      %v386 = vld [vmem:[%s273 + $0x1f8] sm:$0xff]
      %v387 = vld [vmem:[%s273 + $0x200] sm:$0xff]
      %v388 = vld [vmem:[%s273 + $0x208] sm:$0xff]
      %v389 = vld [vmem:[%s273 + $0x210] sm:$0xff]
      %v390 = vld [vmem:[%s273 + $0x218] sm:$0xff]
      %v391 = vld [vmem:[%s273 + $0x220] sm:$0xff]
      %v392 = vld [vmem:[%s273 + $0x228] sm:$0xff]
      %v393 = vld [vmem:[%s273 + $0x230] sm:$0xff]
      %v394 = vld [vmem:[%s273 + $0x238] sm:$0xff]
      %v395 = vld [vmem:[%s273 + $0x240] sm:$0xff]
      %v396 = vld [vmem:[%s273 + $0x248] sm:$0xff]
      %v397 = vld [vmem:[%s273 + $0x250] sm:$0xff]
      %v398 = vld [vmem:[%s273 + $0x258] sm:$0xff]
      %v399 = vld [vmem:[%s273 + $0x260] sm:$0xff]
      %v400 = vld [vmem:[%s273 + $0x268] sm:$0xff]
      %v401 = vld [vmem:[%s273 + $0x270] sm:$0xff]
      %v402 = vld [vmem:[%s273 + $0x278] sm:$0xff]
      %v403 = vld [vmem:[%s273 + $0x280] sm:$0xff]
      %v404 = vld [vmem:[%s273 + $0x288] sm:$0xff]
      %v405 = vld [vmem:[%s273 + $0x290] sm:$0xff]
      %v406 = vld [vmem:[%s273 + $0x298] sm:$0xff]
      %v407 = vld [vmem:[%s273 + $0x2a0] sm:$0xff]
      %v408 = vld [vmem:[%s273 + $0x2a8] sm:$0xff]
      %v409 = vld [vmem:[%s273 + $0x2b0] sm:$0xff]
      %v410 = vld [vmem:[%s273 + $0x2b8] sm:$0xff]
      %v411 = vld [vmem:[%s273 + $0x2c0] sm:$0xff]
      %v412 = vld [vmem:[%s273 + $0x2c8] sm:$0xff]
      %v413 = vld [vmem:[%s273 + $0x2d0] sm:$0xff]
      %v414 = vld [vmem:[%s273 + $0x2d8] sm:$0xff]
      %v415 = vld [vmem:[%s273 + $0x2e0] sm:$0xff]
      %v416 = vld [vmem:[%s273 + $0x2e8] sm:$0xff]
      %v417 = vld [vmem:[%s273 + $0x2f0] sm:$0xff]
      %v418 = vld [vmem:[%s273 + $0x2f8] sm:$0xff]
      %v419 = vld [vmem:[%s273 + $0x300] sm:$0xff]
      %v420 = vld [vmem:[%s273 + $0x308] sm:$0xff]
      %v421 = vld [vmem:[%s273 + $0x310] sm:$0xff]
      %v422 = vld [vmem:[%s273 + $0x318] sm:$0xff]
      %v423 = vld [vmem:[%s273 + $0x320] sm:$0xff]
      %v424 = vld [vmem:[%s273 + $0x328] sm:$0xff]
      %v425 = vld [vmem:[%s273 + $0x330] sm:$0xff]
      %v426 = vld [vmem:[%s273 + $0x338] sm:$0xff]
      %v427 = vld [vmem:[%s273 + $0x340] sm:$0xff]
      %v428 = vld [vmem:[%s273 + $0x348] sm:$0xff]
      %v429 = vld [vmem:[%s273 + $0x350] sm:$0xff]
      %v430 = vld [vmem:[%s273 + $0x358] sm:$0xff]
      %v431 = vld [vmem:[%s273 + $0x360] sm:$0xff]
      %v432 = vld [vmem:[%s273 + $0x368] sm:$0xff]
      %v433 = vld [vmem:[%s273 + $0x370] sm:$0xff]
      %v434 = vld [vmem:[%s273 + $0x378] sm:$0xff]
      %v435 = vld [vmem:[%s273 + $0x380] sm:$0xff]
      %v436 = vld [vmem:[%s273 + $0x388] sm:$0xff]
      %v437 = vld [vmem:[%s273 + $0x390] sm:$0xff]
      %v438 = vld [vmem:[%s273 + $0x398] sm:$0xff]
      %v439 = vld [vmem:[%s273 + $0x3a0] sm:$0xff]
      %v440 = vld [vmem:[%s273 + $0x3a8] sm:$0xff]
      %v441 = vld [vmem:[%s273 + $0x3b0] sm:$0xff]
      %v442 = vld [vmem:[%s273 + $0x3b8] sm:$0xff]
      %v443 = vld [vmem:[%s273 + $0x3c0] sm:$0xff]
      %v444 = vld [vmem:[%s273 + $0x3c8] sm:$0xff]
      %v445 = vld [vmem:[%s273 + $0x3d0] sm:$0xff]
      %v446 = vld [vmem:[%s273 + $0x3d8] sm:$0xff]
      %v447 = vld [vmem:[%s273 + $0x3e0] sm:$0xff]
      %v448 = vld [vmem:[%s273 + $0x3e8] sm:$0xff]
      %v449 = vld [vmem:[%s273 + $0x3f0] sm:$0xff]
      %v450 = vld [vmem:[%s273 + $0x3f8] sm:$0xff]
      %v451 = vld [vmem:[%s273 + $0x400] sm:$0xff]
      %v452 = vld [vmem:[%s273 + $0x408] sm:$0xff]
      %v453 = vld [vmem:[%s273 + $0x410] sm:$0xff]
      %v454 = vld [vmem:[%s273 + $0x418] sm:$0xff]
      %v455 = vld [vmem:[%s273 + $0x420] sm:$0xff]
      %v456 = vld [vmem:[%s273 + $0x428] sm:$0xff]
      %v457 = vld [vmem:[%s273 + $0x430] sm:$0xff]
      %v458 = vld [vmem:[%s273 + $0x438] sm:$0xff]
      %v459 = vld [vmem:[%s273 + $0x440] sm:$0xff]
      %v460 = vld [vmem:[%s273 + $0x448] sm:$0xff]
      %v461 = vld [vmem:[%s273 + $0x450] sm:$0xff]
      %v462 = vld [vmem:[%s273 + $0x458] sm:$0xff]
      %v463 = vld [vmem:[%s273 + $0x460] sm:$0xff]
      %v464 = vld [vmem:[%s273 + $0x468] sm:$0xff]
      %v465 = vld [vmem:[%s273 + $0x470] sm:$0xff]
      %v466 = vld [vmem:[%s273 + $0x478] sm:$0xff]
      %v467 = vld [vmem:[%s273 + $0x480] sm:$0xff]
      %v468 = vld [vmem:[%s273 + $0x488] sm:$0xff]
      %v469 = vld [vmem:[%s273 + $0x490] sm:$0xff]
      %v470 = vld [vmem:[%s273 + $0x498] sm:$0xff]
      %v471 = vld [vmem:[%s273 + $0x4a0] sm:$0xff]
      %v472 = vld [vmem:[%s273 + $0x4a8] sm:$0xff]
      %v473 = vld [vmem:[%s273 + $0x4b0] sm:$0xff]
      %v474 = vld [vmem:[%s273 + $0x4b8] sm:$0xff]
      %v475 = vld [vmem:[%s273 + $0x4c0] sm:$0xff]
      %v476 = vld [vmem:[%s273 + $0x4c8] sm:$0xff]
      %v477 = vld [vmem:[%s273 + $0x4d0] sm:$0xff]
      %v478 = vld [vmem:[%s273 + $0x4d8] sm:$0xff]
      %v479 = vld [vmem:[%s273 + $0x4e0] sm:$0xff]
      %v480 = vld [vmem:[%s273 + $0x4e8] sm:$0xff]
      %v481 = vld [vmem:[%s273 + $0x4f0] sm:$0xff]
      %v482 = vld [vmem:[%s273 + $0x4f8] sm:$0xff]
      %v483 = vld [vmem:[%s273 + $0x500] sm:$0xff]
      %v484 = vld [vmem:[%s273 + $0x508] sm:$0xff]
      %v485 = vld [vmem:[%s273 + $0x510] sm:$0xff]
      %v486 = vld [vmem:[%s273 + $0x518] sm:$0xff]
      %v487 = vld [vmem:[%s273 + $0x520] sm:$0xff]
      %v488 = vld [vmem:[%s273 + $0x528] sm:$0xff]
      %v489 = vld [vmem:[%s273 + $0x530] sm:$0xff]
      %v490 = vld [vmem:[%s273 + $0x538] sm:$0xff]
      %v491 = vld [vmem:[%s273 + $0x540] sm:$0xff]
      %v492 = vld [vmem:[%s273 + $0x548] sm:$0xff]
      %v493 = vld [vmem:[%s273 + $0x550] sm:$0xff]
      %v494 = vld [vmem:[%s273 + $0x558] sm:$0xff]
      %v495 = vld [vmem:[%s273 + $0x560] sm:$0xff]
      %v496 = vld [vmem:[%s273 + $0x568] sm:$0xff]
      %v497 = vld [vmem:[%s273 + $0x570] sm:$0xff]
      %v498 = vld [vmem:[%s273 + $0x578] sm:$0xff]
      %v499 = vld [vmem:[%s273 + $0x580] sm:$0xff]
      %v500 = vld [vmem:[%s273 + $0x588] sm:$0xff]
      %v501 = vld [vmem:[%s273 + $0x590] sm:$0xff]
      %v502 = vld [vmem:[%s273 + $0x598] sm:$0xff]
      %v503 = vld [vmem:[%s273 + $0x5a0] sm:$0xff]
      %v504 = vld [vmem:[%s273 + $0x5a8] sm:$0xff]
      %v505 = vld [vmem:[%s273 + $0x5b0] sm:$0xff]
      %v506 = vld [vmem:[%s273 + $0x5b8] sm:$0xff]
      %v507 = vld [vmem:[%s273 + $0x5c0] sm:$0xff]
      %v508 = vld [vmem:[%s273 + $0x5c8] sm:$0xff]
      %v509 = vld [vmem:[%s273 + $0x5d0] sm:$0xff]
      %v510 = vld [vmem:[%s273 + $0x5d8] sm:$0xff]
      %v511 = vld [vmem:[%s273 + $0x5e0] sm:$0xff]
      %v512 = vld [vmem:[%s273 + $0x5e8] sm:$0xff]
      %v513 = vld [vmem:[%s273 + $0x5f0] sm:$0xff]
      %v514 = vld [vmem:[%s273 + $0x5f8] sm:$0xff]
      %v515 = vld [vmem:[%s295] sm:$0xff]
      %v516 = vld [vmem:[%s295 + $0x8] sm:$0xff]
      %v517 = vld [vmem:[%s295 + $0x10] sm:$0xff]
      %v518 = vld [vmem:[%s295 + $0x18] sm:$0xff]
      %v519 = vld [vmem:[%s295 + $0x20] sm:$0xff]
      %v520 = vld [vmem:[%s295 + $0x28] sm:$0xff]
      %v521 = vld [vmem:[%s295 + $0x30] sm:$0xff]
      %v522 = vld [vmem:[%s295 + $0x38] sm:$0xff]
      %v523 = vld [vmem:[%s295 + $0x40] sm:$0xff]
      %v524 = vld [vmem:[%s295 + $0x48] sm:$0xff]
      %v525 = vld [vmem:[%s295 + $0x50] sm:$0xff]
      %v526 = vld [vmem:[%s295 + $0x58] sm:$0xff]
      %v527 = vld [vmem:[%s295 + $0x60] sm:$0xff]
      %v528 = vld [vmem:[%s295 + $0x68] sm:$0xff]
      %v529 = vld [vmem:[%s295 + $0x70] sm:$0xff]
      %v530 = vld [vmem:[%s295 + $0x78] sm:$0xff]
      %v531 = vld [vmem:[%s295 + $0x80] sm:$0xff]
      %v532 = vld [vmem:[%s295 + $0x88] sm:$0xff]
      %v533 = vld [vmem:[%s295 + $0x90] sm:$0xff]
      %v534 = vld [vmem:[%s295 + $0x98] sm:$0xff]
      %v535 = vld [vmem:[%s295 + $0xa0] sm:$0xff]
      %v536 = vld [vmem:[%s295 + $0xa8] sm:$0xff]
      %v537 = vld [vmem:[%s295 + $0xb0] sm:$0xff]
      %v538 = vld [vmem:[%s295 + $0xb8] sm:$0xff]
      %v539 = vld [vmem:[%s295 + $0xc0] sm:$0xff]
      %v540 = vld [vmem:[%s295 + $0xc8] sm:$0xff]
      %v541 = vld [vmem:[%s295 + $0xd0] sm:$0xff]
      %v542 = vld [vmem:[%s295 + $0xd8] sm:$0xff]
      %v543 = vld [vmem:[%s295 + $0xe0] sm:$0xff]
      %v544 = vld [vmem:[%s295 + $0xe8] sm:$0xff]
      %v545 = vld [vmem:[%s295 + $0xf0] sm:$0xff]
      %v546 = vld [vmem:[%s295 + $0xf8] sm:$0xff]
      %v547 = vld [vmem:[%s295 + $0x100] sm:$0xff]
      %v548 = vld [vmem:[%s295 + $0x108] sm:$0xff]
      %v549 = vld [vmem:[%s295 + $0x110] sm:$0xff]
      %v550 = vld [vmem:[%s295 + $0x118] sm:$0xff]
      %v551 = vld [vmem:[%s295 + $0x120] sm:$0xff]
      %v552 = vld [vmem:[%s295 + $0x128] sm:$0xff]
      %v553 = vld [vmem:[%s295 + $0x130] sm:$0xff]
      %v554 = vld [vmem:[%s295 + $0x138] sm:$0xff]
      %v555 = vld [vmem:[%s295 + $0x140] sm:$0xff]
      %v556 = vld [vmem:[%s295 + $0x148] sm:$0xff]
      %v557 = vld [vmem:[%s295 + $0x150] sm:$0xff]
      %v558 = vld [vmem:[%s295 + $0x158] sm:$0xff]
      %v559 = vld [vmem:[%s295 + $0x160] sm:$0xff]
      %v560 = vld [vmem:[%s295 + $0x168] sm:$0xff]
      %v561 = vld [vmem:[%s295 + $0x170] sm:$0xff]
      %v562 = vld [vmem:[%s295 + $0x178] sm:$0xff]
      %v563 = vld [vmem:[%s295 + $0x180] sm:$0xff]
      %v564 = vld [vmem:[%s295 + $0x188] sm:$0xff]
      %v565 = vld [vmem:[%s295 + $0x190] sm:$0xff]
      %v566 = vld [vmem:[%s295 + $0x198] sm:$0xff]
      %v567 = vld [vmem:[%s295 + $0x1a0] sm:$0xff]
      %v568 = vld [vmem:[%s295 + $0x1a8] sm:$0xff]
      %v569 = vld [vmem:[%s295 + $0x1b0] sm:$0xff]
      %v570 = vld [vmem:[%s295 + $0x1b8] sm:$0xff]
      %v571 = vld [vmem:[%s295 + $0x1c0] sm:$0xff]
      %v572 = vld [vmem:[%s295 + $0x1c8] sm:$0xff]
      %v573 = vld [vmem:[%s295 + $0x1d0] sm:$0xff]
      %v574 = vld [vmem:[%s295 + $0x1d8] sm:$0xff]
      %v575 = vld [vmem:[%s295 + $0x1e0] sm:$0xff]
      %v576 = vld [vmem:[%s295 + $0x1e8] sm:$0xff]
      %v577 = vld [vmem:[%s295 + $0x1f0] sm:$0xff]
      %v578 = vld [vmem:[%s295 + $0x1f8] sm:$0xff]
      %v579 = vld [vmem:[%s295 + $0x200] sm:$0xff]
      %v580 = vld [vmem:[%s295 + $0x208] sm:$0xff]
      %v581 = vld [vmem:[%s295 + $0x210] sm:$0xff]
      %v582 = vld [vmem:[%s295 + $0x218] sm:$0xff]
      %v583 = vld [vmem:[%s295 + $0x220] sm:$0xff]
      %v584 = vld [vmem:[%s295 + $0x228] sm:$0xff]
      %v585 = vld [vmem:[%s295 + $0x230] sm:$0xff]
      %v586 = vld [vmem:[%s295 + $0x238] sm:$0xff]
      %v587 = vld [vmem:[%s295 + $0x240] sm:$0xff]
      %v588 = vld [vmem:[%s295 + $0x248] sm:$0xff]
      %v589 = vld [vmem:[%s295 + $0x250] sm:$0xff]
      %v590 = vld [vmem:[%s295 + $0x258] sm:$0xff]
      %v591 = vld [vmem:[%s295 + $0x260] sm:$0xff]
      %v592 = vld [vmem:[%s295 + $0x268] sm:$0xff]
      %v593 = vld [vmem:[%s295 + $0x270] sm:$0xff]
      %v594 = vld [vmem:[%s295 + $0x278] sm:$0xff]
      %v595 = vld [vmem:[%s295 + $0x280] sm:$0xff]
      %v596 = vld [vmem:[%s295 + $0x288] sm:$0xff]
      %v597 = vld [vmem:[%s295 + $0x290] sm:$0xff]
      %v598 = vld [vmem:[%s295 + $0x298] sm:$0xff]
      %v599 = vld [vmem:[%s295 + $0x2a0] sm:$0xff]
      %v600 = vld [vmem:[%s295 + $0x2a8] sm:$0xff]
      %v601 = vld [vmem:[%s295 + $0x2b0] sm:$0xff]
      %v602 = vld [vmem:[%s295 + $0x2b8] sm:$0xff]
      %v603 = vld [vmem:[%s295 + $0x2c0] sm:$0xff]
      %v604 = vld [vmem:[%s295 + $0x2c8] sm:$0xff]
      %v605 = vld [vmem:[%s295 + $0x2d0] sm:$0xff]
      %v606 = vld [vmem:[%s295 + $0x2d8] sm:$0xff]
      %v607 = vld [vmem:[%s295 + $0x2e0] sm:$0xff]
      %v608 = vld [vmem:[%s295 + $0x2e8] sm:$0xff]
      %v609 = vld [vmem:[%s295 + $0x2f0] sm:$0xff]
      %v610 = vld [vmem:[%s295 + $0x2f8] sm:$0xff]
      %v611 = vld [vmem:[%s295 + $0x300] sm:$0xff]
      %v612 = vld [vmem:[%s295 + $0x308] sm:$0xff]
      %v613 = vld [vmem:[%s295 + $0x310] sm:$0xff]
      %v614 = vld [vmem:[%s295 + $0x318] sm:$0xff]
      %v615 = vld [vmem:[%s295 + $0x320] sm:$0xff]
      %v616 = vld [vmem:[%s295 + $0x328] sm:$0xff]
      %v617 = vld [vmem:[%s295 + $0x330] sm:$0xff]
      %v618 = vld [vmem:[%s295 + $0x338] sm:$0xff]
      %v619 = vld [vmem:[%s295 + $0x340] sm:$0xff]
      %v620 = vld [vmem:[%s295 + $0x348] sm:$0xff]
      %v621 = vld [vmem:[%s295 + $0x350] sm:$0xff]
      %v622 = vld [vmem:[%s295 + $0x358] sm:$0xff]
      %v623 = vld [vmem:[%s295 + $0x360] sm:$0xff]
      %v624 = vld [vmem:[%s295 + $0x368] sm:$0xff]
      %v625 = vld [vmem:[%s295 + $0x370] sm:$0xff]
      %v626 = vld [vmem:[%s295 + $0x378] sm:$0xff]
      %v627 = vld [vmem:[%s295 + $0x380] sm:$0xff]
      %v628 = vld [vmem:[%s295 + $0x388] sm:$0xff]
      %v629 = vld [vmem:[%s295 + $0x390] sm:$0xff]
      %v630 = vld [vmem:[%s295 + $0x398] sm:$0xff]
      %v631 = vld [vmem:[%s295 + $0x3a0] sm:$0xff]
      %v632 = vld [vmem:[%s295 + $0x3a8] sm:$0xff]
      %v633 = vld [vmem:[%s295 + $0x3b0] sm:$0xff]
      %v634 = vld [vmem:[%s295 + $0x3b8] sm:$0xff]
      %v635 = vld [vmem:[%s295 + $0x3c0] sm:$0xff]
      %v636 = vld [vmem:[%s295 + $0x3c8] sm:$0xff]
      %v637 = vld [vmem:[%s295 + $0x3d0] sm:$0xff]
      %v638 = vld [vmem:[%s295 + $0x3d8] sm:$0xff]
      %v639 = vld [vmem:[%s295 + $0x3e0] sm:$0xff]
      %v640 = vld [vmem:[%s295 + $0x3e8] sm:$0xff]
      %v641 = vld [vmem:[%s295 + $0x3f0] sm:$0xff]
      %v642 = vld [vmem:[%s295 + $0x3f8] sm:$0xff]
      %v643 = vld [vmem:[%s295 + $0x400] sm:$0xff]
      %v644 = vld [vmem:[%s295 + $0x408] sm:$0xff]
      %v645 = vld [vmem:[%s295 + $0x410] sm:$0xff]
      %v646 = vld [vmem:[%s295 + $0x418] sm:$0xff]
      %v647 = vld [vmem:[%s295 + $0x420] sm:$0xff]
      %v648 = vld [vmem:[%s295 + $0x428] sm:$0xff]
      %v649 = vld [vmem:[%s295 + $0x430] sm:$0xff]
      %v650 = vld [vmem:[%s295 + $0x438] sm:$0xff]
      %v651 = vld [vmem:[%s295 + $0x440] sm:$0xff]
      %v652 = vld [vmem:[%s295 + $0x448] sm:$0xff]
      %v653 = vld [vmem:[%s295 + $0x450] sm:$0xff]
      %v654 = vld [vmem:[%s295 + $0x458] sm:$0xff]
      %v655 = vld [vmem:[%s295 + $0x460] sm:$0xff]
      %v656 = vld [vmem:[%s295 + $0x468] sm:$0xff]
      %v657 = vld [vmem:[%s295 + $0x470] sm:$0xff]
      %v658 = vld [vmem:[%s295 + $0x478] sm:$0xff]
      %v659 = vld [vmem:[%s295 + $0x480] sm:$0xff]
      %v660 = vld [vmem:[%s295 + $0x488] sm:$0xff]
      %v661 = vld [vmem:[%s295 + $0x490] sm:$0xff]
      %v662 = vld [vmem:[%s295 + $0x498] sm:$0xff]
      %v663 = vld [vmem:[%s295 + $0x4a0] sm:$0xff]
      %v664 = vld [vmem:[%s295 + $0x4a8] sm:$0xff]
      %v665 = vld [vmem:[%s295 + $0x4b0] sm:$0xff]
      %v666 = vld [vmem:[%s295 + $0x4b8] sm:$0xff]
      %v667 = vld [vmem:[%s295 + $0x4c0] sm:$0xff]
      %v668 = vld [vmem:[%s295 + $0x4c8] sm:$0xff]
      %v669 = vld [vmem:[%s295 + $0x4d0] sm:$0xff]
      %v670 = vld [vmem:[%s295 + $0x4d8] sm:$0xff]
      %v671 = vld [vmem:[%s295 + $0x4e0] sm:$0xff]
      %v672 = vld [vmem:[%s295 + $0x4e8] sm:$0xff]
      %v673 = vld [vmem:[%s295 + $0x4f0] sm:$0xff]
      %v674 = vld [vmem:[%s295 + $0x4f8] sm:$0xff]
      %v675 = vld [vmem:[%s295 + $0x500] sm:$0xff]
      %v676 = vld [vmem:[%s295 + $0x508] sm:$0xff]
      %v677 = vld [vmem:[%s295 + $0x510] sm:$0xff]
      %v678 = vld [vmem:[%s295 + $0x518] sm:$0xff]
      %v679 = vld [vmem:[%s295 + $0x520] sm:$0xff]
      %v680 = vld [vmem:[%s295 + $0x528] sm:$0xff]
      %v681 = vld [vmem:[%s295 + $0x530] sm:$0xff]
      %v682 = vld [vmem:[%s295 + $0x538] sm:$0xff]
      %v683 = vld [vmem:[%s295 + $0x540] sm:$0xff]
      %v684 = vld [vmem:[%s295 + $0x548] sm:$0xff]
      %v685 = vld [vmem:[%s295 + $0x550] sm:$0xff]
      %v686 = vld [vmem:[%s295 + $0x558] sm:$0xff]
      %v687 = vld [vmem:[%s295 + $0x560] sm:$0xff]
      %v688 = vld [vmem:[%s295 + $0x568] sm:$0xff]
      %v689 = vld [vmem:[%s295 + $0x570] sm:$0xff]
      %v690 = vld [vmem:[%s295 + $0x578] sm:$0xff]
      %v691 = vld [vmem:[%s295 + $0x580] sm:$0xff]
      %v692 = vld [vmem:[%s295 + $0x588] sm:$0xff]
      %v693 = vld [vmem:[%s295 + $0x590] sm:$0xff]
      %v694 = vld [vmem:[%s295 + $0x598] sm:$0xff]
      %v695 = vld [vmem:[%s295 + $0x5a0] sm:$0xff]
      %v696 = vld [vmem:[%s295 + $0x5a8] sm:$0xff]
      %v697 = vld [vmem:[%s295 + $0x5b0] sm:$0xff]
      %v698 = vld [vmem:[%s295 + $0x5b8] sm:$0xff]
      %v699 = vld [vmem:[%s295 + $0x5c0] sm:$0xff]
      %v700 = vld [vmem:[%s295 + $0x5c8] sm:$0xff]
      %v701 = vld [vmem:[%s295 + $0x5d0] sm:$0xff]
      %v702 = vld [vmem:[%s295 + $0x5d8] sm:$0xff]
      %v703 = vld [vmem:[%s295 + $0x5e0] sm:$0xff]
      %v704 = vld [vmem:[%s295 + $0x5e8] sm:$0xff]
      %v705 = vld [vmem:[%s295 + $0x5f0] sm:$0xff]
      %v706 = vld [vmem:[%s295 + $0x5f8] sm:$0xff]
      %vm707 = vcmp.ne.f32.partialorder %v515, -100.0
      %vm708 = vcmp.ne.f32.partialorder %v516, -100.0
      %vm709 = vcmp.ne.f32.partialorder %v517, -100.0
      %vm710 = vcmp.ne.f32.partialorder %v518, -100.0
      %vm711 = vcmp.ne.f32.partialorder %v519, -100.0
      %vm712 = vcmp.ne.f32.partialorder %v520, -100.0
      %vm713 = vcmp.ne.f32.partialorder %v521, -100.0
      %vm714 = vcmp.ne.f32.partialorder %v522, -100.0
      %vm715 = vcmp.ne.f32.partialorder %v523, -100.0
      %vm716 = vcmp.ne.f32.partialorder %v524, -100.0
      %vm717 = vcmp.ne.f32.partialorder %v525, -100.0
      %vm718 = vcmp.ne.f32.partialorder %v526, -100.0
      %vm719 = vcmp.ne.f32.partialorder %v527, -100.0
      %vm720 = vcmp.ne.f32.partialorder %v528, -100.0
      %vm721 = vcmp.ne.f32.partialorder %v529, -100.0
      %vm722 = vcmp.ne.f32.partialorder %v530, -100.0
      %vm723 = vcmp.ne.f32.partialorder %v531, -100.0
      %vm724 = vcmp.ne.f32.partialorder %v532, -100.0
      %vm725 = vcmp.ne.f32.partialorder %v533, -100.0
      %vm726 = vcmp.ne.f32.partialorder %v534, -100.0
      %vm727 = vcmp.ne.f32.partialorder %v535, -100.0
      %vm728 = vcmp.ne.f32.partialorder %v536, -100.0
      %vm729 = vcmp.ne.f32.partialorder %v537, -100.0
      %vm730 = vcmp.ne.f32.partialorder %v538, -100.0
      %vm731 = vcmp.ne.f32.partialorder %v539, -100.0
      %vm732 = vcmp.ne.f32.partialorder %v540, -100.0
      %vm733 = vcmp.ne.f32.partialorder %v541, -100.0
      %vm734 = vcmp.ne.f32.partialorder %v542, -100.0
      %vm735 = vcmp.ne.f32.partialorder %v543, -100.0
      %vm736 = vcmp.ne.f32.partialorder %v544, -100.0
      %vm737 = vcmp.ne.f32.partialorder %v545, -100.0
      %vm738 = vcmp.ne.f32.partialorder %v546, -100.0
      %vm739 = vcmp.ne.f32.partialorder %v547, -100.0
      %vm740 = vcmp.ne.f32.partialorder %v548, -100.0
      %vm741 = vcmp.ne.f32.partialorder %v549, -100.0
      %vm742 = vcmp.ne.f32.partialorder %v550, -100.0
      %vm743 = vcmp.ne.f32.partialorder %v551, -100.0
      %vm744 = vcmp.ne.f32.partialorder %v552, -100.0
      %vm745 = vcmp.ne.f32.partialorder %v553, -100.0
      %vm746 = vcmp.ne.f32.partialorder %v554, -100.0
      %vm747 = vcmp.ne.f32.partialorder %v555, -100.0
      %vm748 = vcmp.ne.f32.partialorder %v556, -100.0
      %vm749 = vcmp.ne.f32.partialorder %v557, -100.0
      %vm750 = vcmp.ne.f32.partialorder %v558, -100.0
      %vm751 = vcmp.ne.f32.partialorder %v559, -100.0
      %vm752 = vcmp.ne.f32.partialorder %v560, -100.0
      %vm753 = vcmp.ne.f32.partialorder %v561, -100.0
      %vm754 = vcmp.ne.f32.partialorder %v562, -100.0
      %vm755 = vcmp.ne.f32.partialorder %v563, -100.0
      %vm756 = vcmp.ne.f32.partialorder %v564, -100.0
      %vm757 = vcmp.ne.f32.partialorder %v565, -100.0
      %vm758 = vcmp.ne.f32.partialorder %v566, -100.0
      %vm759 = vcmp.ne.f32.partialorder %v567, -100.0
      %vm760 = vcmp.ne.f32.partialorder %v568, -100.0
      %vm761 = vcmp.ne.f32.partialorder %v569, -100.0
      %vm762 = vcmp.ne.f32.partialorder %v570, -100.0
      %vm763 = vcmp.ne.f32.partialorder %v571, -100.0
      %vm764 = vcmp.ne.f32.partialorder %v572, -100.0
      %vm765 = vcmp.ne.f32.partialorder %v573, -100.0
      %vm766 = vcmp.ne.f32.partialorder %v574, -100.0
      %vm767 = vcmp.ne.f32.partialorder %v575, -100.0
      %vm768 = vcmp.ne.f32.partialorder %v576, -100.0
      %vm769 = vcmp.ne.f32.partialorder %v577, -100.0
      %vm770 = vcmp.ne.f32.partialorder %v578, -100.0
      %vm771 = vcmp.ne.f32.partialorder %v579, -100.0
      %vm772 = vcmp.ne.f32.partialorder %v580, -100.0
      %vm773 = vcmp.ne.f32.partialorder %v581, -100.0
      %vm774 = vcmp.ne.f32.partialorder %v582, -100.0
      %vm775 = vcmp.ne.f32.partialorder %v583, -100.0
      %vm776 = vcmp.ne.f32.partialorder %v584, -100.0
      %vm777 = vcmp.ne.f32.partialorder %v585, -100.0
      %vm778 = vcmp.ne.f32.partialorder %v586, -100.0
      %vm779 = vcmp.ne.f32.partialorder %v587, -100.0
      %vm780 = vcmp.ne.f32.partialorder %v588, -100.0
      %vm781 = vcmp.ne.f32.partialorder %v589, -100.0
      %vm782 = vcmp.ne.f32.partialorder %v590, -100.0
      %vm783 = vcmp.ne.f32.partialorder %v591, -100.0
      %vm784 = vcmp.ne.f32.partialorder %v592, -100.0
      %vm785 = vcmp.ne.f32.partialorder %v593, -100.0
      %vm786 = vcmp.ne.f32.partialorder %v594, -100.0
      %vm787 = vcmp.ne.f32.partialorder %v595, -100.0
      %vm788 = vcmp.ne.f32.partialorder %v596, -100.0
      %vm789 = vcmp.ne.f32.partialorder %v597, -100.0
      %vm790 = vcmp.ne.f32.partialorder %v598, -100.0
      %vm791 = vcmp.ne.f32.partialorder %v599, -100.0
      %vm792 = vcmp.ne.f32.partialorder %v600, -100.0
      %vm793 = vcmp.ne.f32.partialorder %v601, -100.0
      %vm794 = vcmp.ne.f32.partialorder %v602, -100.0
      %vm795 = vcmp.ne.f32.partialorder %v603, -100.0
      %vm796 = vcmp.ne.f32.partialorder %v604, -100.0
      %vm797 = vcmp.ne.f32.partialorder %v605, -100.0
      %vm798 = vcmp.ne.f32.partialorder %v606, -100.0
      %vm799 = vcmp.ne.f32.partialorder %v607, -100.0
      %vm800 = vcmp.ne.f32.partialorder %v608, -100.0
      %vm801 = vcmp.ne.f32.partialorder %v609, -100.0
      %vm802 = vcmp.ne.f32.partialorder %v610, -100.0
      %vm803 = vcmp.ne.f32.partialorder %v611, -100.0
      %vm804 = vcmp.ne.f32.partialorder %v612, -100.0
      %vm805 = vcmp.ne.f32.partialorder %v613, -100.0
      %vm806 = vcmp.ne.f32.partialorder %v614, -100.0
      %vm807 = vcmp.ne.f32.partialorder %v615, -100.0
      %vm808 = vcmp.ne.f32.partialorder %v616, -100.0
      %vm809 = vcmp.ne.f32.partialorder %v617, -100.0
      %vm810 = vcmp.ne.f32.partialorder %v618, -100.0
      %vm811 = vcmp.ne.f32.partialorder %v619, -100.0
      %vm812 = vcmp.ne.f32.partialorder %v620, -100.0
      %vm813 = vcmp.ne.f32.partialorder %v621, -100.0
      %vm814 = vcmp.ne.f32.partialorder %v622, -100.0
      %vm815 = vcmp.ne.f32.partialorder %v623, -100.0
      %vm816 = vcmp.ne.f32.partialorder %v624, -100.0
      %vm817 = vcmp.ne.f32.partialorder %v625, -100.0
      %vm818 = vcmp.ne.f32.partialorder %v626, -100.0
      %vm819 = vcmp.ne.f32.partialorder %v627, -100.0
      %vm820 = vcmp.ne.f32.partialorder %v628, -100.0
      %vm821 = vcmp.ne.f32.partialorder %v629, -100.0
      %vm822 = vcmp.ne.f32.partialorder %v630, -100.0
      %vm823 = vcmp.ne.f32.partialorder %v631, -100.0
      %vm824 = vcmp.ne.f32.partialorder %v632, -100.0
      %vm825 = vcmp.ne.f32.partialorder %v633, -100.0
      %vm826 = vcmp.ne.f32.partialorder %v634, -100.0
      %vm827 = vcmp.ne.f32.partialorder %v635, -100.0
      %vm828 = vcmp.ne.f32.partialorder %v636, -100.0
      %vm829 = vcmp.ne.f32.partialorder %v637, -100.0
      %vm830 = vcmp.ne.f32.partialorder %v638, -100.0
      %vm831 = vcmp.ne.f32.partialorder %v639, -100.0
      %vm832 = vcmp.ne.f32.partialorder %v640, -100.0
      %vm833 = vcmp.ne.f32.partialorder %v641, -100.0
      %vm834 = vcmp.ne.f32.partialorder %v642, -100.0
      %vm835 = vcmp.ne.f32.partialorder %v643, -100.0
      %vm836 = vcmp.ne.f32.partialorder %v644, -100.0
      %vm837 = vcmp.ne.f32.partialorder %v645, -100.0
      %vm838 = vcmp.ne.f32.partialorder %v646, -100.0
      %vm839 = vcmp.ne.f32.partialorder %v647, -100.0
      %vm840 = vcmp.ne.f32.partialorder %v648, -100.0
      %vm841 = vcmp.ne.f32.partialorder %v649, -100.0
      %vm842 = vcmp.ne.f32.partialorder %v650, -100.0
      %vm843 = vcmp.ne.f32.partialorder %v651, -100.0
      %vm844 = vcmp.ne.f32.partialorder %v652, -100.0
      %vm845 = vcmp.ne.f32.partialorder %v653, -100.0
      %vm846 = vcmp.ne.f32.partialorder %v654, -100.0
      %vm847 = vcmp.ne.f32.partialorder %v655, -100.0
      %vm848 = vcmp.ne.f32.partialorder %v656, -100.0
      %vm849 = vcmp.ne.f32.partialorder %v657, -100.0
      %vm850 = vcmp.ne.f32.partialorder %v658, -100.0
      %vm851 = vcmp.ne.f32.partialorder %v659, -100.0
      %vm852 = vcmp.ne.f32.partialorder %v660, -100.0
      %vm853 = vcmp.ne.f32.partialorder %v661, -100.0
      %vm854 = vcmp.ne.f32.partialorder %v662, -100.0
      %vm855 = vcmp.ne.f32.partialorder %v663, -100.0
      %vm856 = vcmp.ne.f32.partialorder %v664, -100.0
      %vm857 = vcmp.ne.f32.partialorder %v665, -100.0
      %vm858 = vcmp.ne.f32.partialorder %v666, -100.0
      %vm859 = vcmp.ne.f32.partialorder %v667, -100.0
      %vm860 = vcmp.ne.f32.partialorder %v668, -100.0
      %vm861 = vcmp.ne.f32.partialorder %v669, -100.0
      %vm862 = vcmp.ne.f32.partialorder %v670, -100.0
      %vm863 = vcmp.ne.f32.partialorder %v671, -100.0
      %vm864 = vcmp.ne.f32.partialorder %v672, -100.0
      %vm865 = vcmp.ne.f32.partialorder %v673, -100.0
      %vm866 = vcmp.ne.f32.partialorder %v674, -100.0
      %vm867 = vcmp.ne.f32.partialorder %v675, -100.0
      %vm868 = vcmp.ne.f32.partialorder %v676, -100.0
      %vm869 = vcmp.ne.f32.partialorder %v677, -100.0
      %vm870 = vcmp.ne.f32.partialorder %v678, -100.0
      %vm871 = vcmp.ne.f32.partialorder %v679, -100.0
      %vm872 = vcmp.ne.f32.partialorder %v680, -100.0
      %vm873 = vcmp.ne.f32.partialorder %v681, -100.0
      %vm874 = vcmp.ne.f32.partialorder %v682, -100.0
      %vm875 = vcmp.ne.f32.partialorder %v683, -100.0
      %vm876 = vcmp.ne.f32.partialorder %v684, -100.0
      %vm877 = vcmp.ne.f32.partialorder %v685, -100.0
      %vm878 = vcmp.ne.f32.partialorder %v686, -100.0
      %vm879 = vcmp.ne.f32.partialorder %v687, -100.0
      %vm880 = vcmp.ne.f32.partialorder %v688, -100.0
      %vm881 = vcmp.ne.f32.partialorder %v689, -100.0
      %vm882 = vcmp.ne.f32.partialorder %v690, -100.0
      %vm883 = vcmp.ne.f32.partialorder %v691, -100.0
      %vm884 = vcmp.ne.f32.partialorder %v692, -100.0
      %vm885 = vcmp.ne.f32.partialorder %v693, -100.0
      %vm886 = vcmp.ne.f32.partialorder %v694, -100.0
      %vm887 = vcmp.ne.f32.partialorder %v695, -100.0
      %vm888 = vcmp.ne.f32.partialorder %v696, -100.0
      %vm889 = vcmp.ne.f32.partialorder %v697, -100.0
      %vm890 = vcmp.ne.f32.partialorder %v698, -100.0
      %vm891 = vcmp.ne.f32.partialorder %v699, -100.0
      %vm892 = vcmp.ne.f32.partialorder %v700, -100.0
      %vm893 = vcmp.ne.f32.partialorder %v701, -100.0
      %vm894 = vcmp.ne.f32.partialorder %v702, -100.0
      %vm895 = vcmp.ne.f32.partialorder %v703, -100.0
      %vm896 = vcmp.ne.f32.partialorder %v704, -100.0
      %vm897 = vcmp.ne.f32.partialorder %v705, -100.0
      %vm898 = vcmp.ne.f32.partialorder %v706, -100.0
      %v899 = vlaneseq
      %v900 = vshrl.u32 %v899, 7
      %v901 = vadd.s32 %v900, 8
      %v902 = vadd.s32 %v900, 16
      %v903 = vadd.s32 %v900, 24
      %v904 = vadd.s32 %v900, 32
      %v905 = vadd.s32 %v900, 40
      %v906 = vadd.s32 %v900, 48
      %v907 = vadd.s32 %v900, 56
      %v908 = vadd.s32 %v900, 64
      %v909 = vadd.s32 %v900, 72
      %v910 = vadd.s32 %v900, 80
      %v911 = vadd.s32 %v900, 88
      %v912 = vadd.s32 %v900, 96
      %v913 = vadd.s32 %v900, 104
      %v914 = vadd.s32 %v900, 112
      %v915 = vadd.s32 %v900, 120
      %v916 = vadd.s32 %v900, 128
      %v917 = vadd.s32 %v900, 136
      %v918 = vadd.s32 %v900, 144
      %v919 = vadd.s32 %v900, 152
      %v920 = vadd.s32 %v900, 160
      %v921 = vadd.s32 %v900, 168
      %v922 = vadd.s32 %v900, 176
      %v923 = vadd.s32 %v900, 184
      %v924 = vadd.s32 %v900, 192
      %v925 = vadd.s32 %v900, 200
      %v926 = vadd.s32 %v900, 208
      %v927 = vadd.s32 %v900, 216
      %v928 = vadd.s32 %v900, 224
      %v929 = vadd.s32 %v900, 232
      %v930 = vadd.s32 %v900, 240
      %v931 = vadd.s32 %v900, 248
      %v932 = vadd.s32 %v900, 256
      %v933 = vadd.s32 %v900, 264
      %v934 = vadd.s32 %v900, 272
      %v935 = vadd.s32 %v900, 280
      %v936 = vadd.s32 %v900, 288
      %v937 = vadd.s32 %v900, 296
      %v938 = vadd.s32 %v900, 304
      %v939 = vadd.s32 %v900, 312
      %v940 = vadd.s32 %v900, 320
      %v941 = vadd.s32 %v900, 328
      %v942 = vadd.s32 %v900, 336
      %v943 = vadd.s32 %v900, 344
      %v944 = vadd.s32 %v900, 352
      %v945 = vadd.s32 %v900, 360
      %v946 = vadd.s32 %v900, 368
      %v947 = vadd.s32 %v900, 376
      %v948 = vadd.s32 %v900, 384
      %v949 = vadd.s32 %v900, 392
      %v950 = vadd.s32 %v900, 400
      %v951 = vadd.s32 %v900, 408
      %v952 = vadd.s32 %v900, 416
      %v953 = vadd.s32 %v900, 424
      %v954 = vadd.s32 %v900, 432
      %v955 = vadd.s32 %v900, 440
      %v956 = vadd.s32 %v900, 448
      %v957 = vadd.s32 %v900, 456
      %v958 = vadd.s32 %v900, 464
      %v959 = vadd.s32 %v900, 472
      %v960 = vadd.s32 %v900, 480
      %v961 = vadd.s32 %v900, 488
      %v962 = vadd.s32 %v900, 496
      %v963 = vadd.s32 %v900, 504
      %s964 = smul.u32 %s19, 512
      %v965 = vstv %s964
      %v966 = vadd.s32 %v900, %v965
      %v967 = vadd.s32 %v901, %v965
      %v968 = vadd.s32 %v902, %v965
      %v969 = vadd.s32 %v903, %v965
      %v970 = vadd.s32 %v904, %v965
      %v971 = vadd.s32 %v905, %v965
      %v972 = vadd.s32 %v906, %v965
      %v973 = vadd.s32 %v907, %v965
      %v974 = vadd.s32 %v908, %v965
      %v975 = vadd.s32 %v909, %v965
      %v976 = vadd.s32 %v910, %v965
      %v977 = vadd.s32 %v911, %v965
      %v978 = vadd.s32 %v912, %v965
      %v979 = vadd.s32 %v913, %v965
      %v980 = vadd.s32 %v914, %v965
      %v981 = vadd.s32 %v915, %v965
      %v982 = vadd.s32 %v916, %v965
      %v983 = vadd.s32 %v917, %v965
      %v984 = vadd.s32 %v918, %v965
      %v985 = vadd.s32 %v919, %v965
      %v986 = vadd.s32 %v920, %v965
      %v987 = vadd.s32 %v921, %v965
      %v988 = vadd.s32 %v922, %v965
      %v989 = vadd.s32 %v923, %v965
      %v990 = vadd.s32 %v924, %v965
      %v991 = vadd.s32 %v925, %v965
      %v992 = vadd.s32 %v926, %v965
      %v993 = vadd.s32 %v927, %v965
      %v994 = vadd.s32 %v928, %v965
      %v995 = vadd.s32 %v929, %v965
      %v996 = vadd.s32 %v930, %v965
      %v997 = vadd.s32 %v931, %v965
      %v998 = vadd.s32 %v932, %v965
      %v999 = vadd.s32 %v933, %v965
      %v1000 = vadd.s32 %v934, %v965
      %v1001 = vadd.s32 %v935, %v965
      %v1002 = vadd.s32 %v936, %v965
      %v1003 = vadd.s32 %v937, %v965
      %v1004 = vadd.s32 %v938, %v965
      %v1005 = vadd.s32 %v939, %v965
      %v1006 = vadd.s32 %v940, %v965
      %v1007 = vadd.s32 %v941, %v965
      %v1008 = vadd.s32 %v942, %v965
      %v1009 = vadd.s32 %v943, %v965
      %v1010 = vadd.s32 %v944, %v965
      %v1011 = vadd.s32 %v945, %v965
      %v1012 = vadd.s32 %v946, %v965
      %v1013 = vadd.s32 %v947, %v965
      %v1014 = vadd.s32 %v948, %v965
      %v1015 = vadd.s32 %v949, %v965
      %v1016 = vadd.s32 %v950, %v965
      %v1017 = vadd.s32 %v951, %v965
      %v1018 = vadd.s32 %v952, %v965
      %v1019 = vadd.s32 %v953, %v965
      %v1020 = vadd.s32 %v954, %v965
      %v1021 = vadd.s32 %v955, %v965
      %v1022 = vadd.s32 %v956, %v965
      %v1023 = vadd.s32 %v957, %v965
      %v1024 = vadd.s32 %v958, %v965
      %v1025 = vadd.s32 %v959, %v965
      %v1026 = vadd.s32 %v960, %v965
      %v1027 = vadd.s32 %v961, %v965
      %v1028 = vadd.s32 %v962, %v965
      %v1029 = vadd.s32 %v963, %v965
      %vm1030 = vcmp.lt.s32.totalorder %v966, 777
      %vm1031 = vcmp.lt.s32.totalorder %v967, 777
      %vm1032 = vcmp.lt.s32.totalorder %v968, 777
      %vm1033 = vcmp.lt.s32.totalorder %v969, 777
      %vm1034 = vcmp.lt.s32.totalorder %v970, 777
      %vm1035 = vcmp.lt.s32.totalorder %v971, 777
      %vm1036 = vcmp.lt.s32.totalorder %v972, 777
      %vm1037 = vcmp.lt.s32.totalorder %v973, 777
      %vm1038 = vcmp.lt.s32.totalorder %v974, 777
      %vm1039 = vcmp.lt.s32.totalorder %v975, 777
      %vm1040 = vcmp.lt.s32.totalorder %v976, 777
      %vm1041 = vcmp.lt.s32.totalorder %v977, 777
      %vm1042 = vcmp.lt.s32.totalorder %v978, 777
      %vm1043 = vcmp.lt.s32.totalorder %v979, 777
      %vm1044 = vcmp.lt.s32.totalorder %v980, 777
      %vm1045 = vcmp.lt.s32.totalorder %v981, 777
      %vm1046 = vcmp.lt.s32.totalorder %v982, 777
      %vm1047 = vcmp.lt.s32.totalorder %v983, 777
      %vm1048 = vcmp.lt.s32.totalorder %v984, 777
      %vm1049 = vcmp.lt.s32.totalorder %v985, 777
      %vm1050 = vcmp.lt.s32.totalorder %v986, 777
      %vm1051 = vcmp.lt.s32.totalorder %v987, 777
      %vm1052 = vcmp.lt.s32.totalorder %v988, 777
      %vm1053 = vcmp.lt.s32.totalorder %v989, 777
      %vm1054 = vcmp.lt.s32.totalorder %v990, 777
      %vm1055 = vcmp.lt.s32.totalorder %v991, 777
      %vm1056 = vcmp.lt.s32.totalorder %v992, 777
      %vm1057 = vcmp.lt.s32.totalorder %v993, 777
      %vm1058 = vcmp.lt.s32.totalorder %v994, 777
      %vm1059 = vcmp.lt.s32.totalorder %v995, 777
      %vm1060 = vcmp.lt.s32.totalorder %v996, 777
      %vm1061 = vcmp.lt.s32.totalorder %v997, 777
      %vm1062 = vcmp.lt.s32.totalorder %v998, 777
      %vm1063 = vcmp.lt.s32.totalorder %v999, 777
      %vm1064 = vcmp.lt.s32.totalorder %v1000, 777
      %vm1065 = vcmp.lt.s32.totalorder %v1001, 777
      %vm1066 = vcmp.lt.s32.totalorder %v1002, 777
      %vm1067 = vcmp.lt.s32.totalorder %v1003, 777
      %vm1068 = vcmp.lt.s32.totalorder %v1004, 777
      %vm1069 = vcmp.lt.s32.totalorder %v1005, 777
      %vm1070 = vcmp.lt.s32.totalorder %v1006, 777
      %vm1071 = vcmp.lt.s32.totalorder %v1007, 777
      %vm1072 = vcmp.lt.s32.totalorder %v1008, 777
      %vm1073 = vcmp.lt.s32.totalorder %v1009, 777
      %vm1074 = vcmp.lt.s32.totalorder %v1010, 777
      %vm1075 = vcmp.lt.s32.totalorder %v1011, 777
      %vm1076 = vcmp.lt.s32.totalorder %v1012, 777
      %vm1077 = vcmp.lt.s32.totalorder %v1013, 777
      %vm1078 = vcmp.lt.s32.totalorder %v1014, 777
      %vm1079 = vcmp.lt.s32.totalorder %v1015, 777
      %vm1080 = vcmp.lt.s32.totalorder %v1016, 777
      %vm1081 = vcmp.lt.s32.totalorder %v1017, 777
      %vm1082 = vcmp.lt.s32.totalorder %v1018, 777
      %vm1083 = vcmp.lt.s32.totalorder %v1019, 777
      %vm1084 = vcmp.lt.s32.totalorder %v1020, 777
      %vm1085 = vcmp.lt.s32.totalorder %v1021, 777
      %vm1086 = vcmp.lt.s32.totalorder %v1022, 777
      %vm1087 = vcmp.lt.s32.totalorder %v1023, 777
      %vm1088 = vcmp.lt.s32.totalorder %v1024, 777
      %vm1089 = vcmp.lt.s32.totalorder %v1025, 777
      %vm1090 = vcmp.lt.s32.totalorder %v1026, 777
      %vm1091 = vcmp.lt.s32.totalorder %v1027, 777
      %vm1092 = vcmp.lt.s32.totalorder %v1028, 777
      %vm1093 = vcmp.lt.s32.totalorder %v1029, 777
      %vm1094 = vmand %vm707, %vm1030
      %vm1095 = vmand %vm708, %vm1030
      %vm1096 = vmand %vm709, %vm1030
      %vm1097 = vmand %vm710, %vm1031
      %vm1098 = vmand %vm711, %vm1031
      %vm1099 = vmand %vm712, %vm1031
      %vm1100 = vmand %vm713, %vm1032
      %vm1101 = vmand %vm714, %vm1032
      %vm1102 = vmand %vm715, %vm1032
      %vm1103 = vmand %vm716, %vm1033
      %vm1104 = vmand %vm717, %vm1033
      %vm1105 = vmand %vm718, %vm1033
      %vm1106 = vmand %vm719, %vm1034
      %vm1107 = vmand %vm720, %vm1034
      %vm1108 = vmand %vm721, %vm1034
      %vm1109 = vmand %vm722, %vm1035
      %vm1110 = vmand %vm723, %vm1035
      %vm1111 = vmand %vm724, %vm1035
      %vm1112 = vmand %vm725, %vm1036
      %vm1113 = vmand %vm726, %vm1036
      %vm1114 = vmand %vm727, %vm1036
      %vm1115 = vmand %vm728, %vm1037
      %vm1116 = vmand %vm729, %vm1037
      %vm1117 = vmand %vm730, %vm1037
      %vm1118 = vmand %vm731, %vm1038
      %vm1119 = vmand %vm732, %vm1038
      %vm1120 = vmand %vm733, %vm1038
      %vm1121 = vmand %vm734, %vm1039
      %vm1122 = vmand %vm735, %vm1039
      %vm1123 = vmand %vm736, %vm1039
      %vm1124 = vmand %vm737, %vm1040
      %vm1125 = vmand %vm738, %vm1040
      %vm1126 = vmand %vm739, %vm1040
      %vm1127 = vmand %vm740, %vm1041
      %vm1128 = vmand %vm741, %vm1041
      %vm1129 = vmand %vm742, %vm1041
      %vm1130 = vmand %vm743, %vm1042
      %vm1131 = vmand %vm744, %vm1042
      %vm1132 = vmand %vm745, %vm1042
      %vm1133 = vmand %vm746, %vm1043
      %vm1134 = vmand %vm747, %vm1043
      %vm1135 = vmand %vm748, %vm1043
      %vm1136 = vmand %vm749, %vm1044
      %vm1137 = vmand %vm750, %vm1044
      %vm1138 = vmand %vm751, %vm1044
      %vm1139 = vmand %vm752, %vm1045
      %vm1140 = vmand %vm753, %vm1045
      %vm1141 = vmand %vm754, %vm1045
      %vm1142 = vmand %vm755, %vm1046
      %vm1143 = vmand %vm756, %vm1046
      %vm1144 = vmand %vm757, %vm1046
      %vm1145 = vmand %vm758, %vm1047
      %vm1146 = vmand %vm759, %vm1047
      %vm1147 = vmand %vm760, %vm1047
      %vm1148 = vmand %vm761, %vm1048
      %vm1149 = vmand %vm762, %vm1048
      %vm1150 = vmand %vm763, %vm1048
      %vm1151 = vmand %vm764, %vm1049
      %vm1152 = vmand %vm765, %vm1049
      %vm1153 = vmand %vm766, %vm1049
      %vm1154 = vmand %vm767, %vm1050
      %vm1155 = vmand %vm768, %vm1050
      %vm1156 = vmand %vm769, %vm1050
      %vm1157 = vmand %vm770, %vm1051
      %vm1158 = vmand %vm771, %vm1051
      %vm1159 = vmand %vm772, %vm1051
      %vm1160 = vmand %vm773, %vm1052
      %vm1161 = vmand %vm774, %vm1052
      %vm1162 = vmand %vm775, %vm1052
      %vm1163 = vmand %vm776, %vm1053
      %vm1164 = vmand %vm777, %vm1053
      %vm1165 = vmand %vm778, %vm1053
      %vm1166 = vmand %vm779, %vm1054
      %vm1167 = vmand %vm780, %vm1054
      %vm1168 = vmand %vm781, %vm1054
      %vm1169 = vmand %vm782, %vm1055
      %vm1170 = vmand %vm783, %vm1055
      %vm1171 = vmand %vm784, %vm1055
      %vm1172 = vmand %vm785, %vm1056
      %vm1173 = vmand %vm786, %vm1056
      %vm1174 = vmand %vm787, %vm1056
      %vm1175 = vmand %vm788, %vm1057
      %vm1176 = vmand %vm789, %vm1057
      %vm1177 = vmand %vm790, %vm1057
      %vm1178 = vmand %vm791, %vm1058
      %vm1179 = vmand %vm792, %vm1058
      %vm1180 = vmand %vm793, %vm1058
      %vm1181 = vmand %vm794, %vm1059
      %vm1182 = vmand %vm795, %vm1059
      %vm1183 = vmand %vm796, %vm1059
      %vm1184 = vmand %vm797, %vm1060
      %vm1185 = vmand %vm798, %vm1060
      %vm1186 = vmand %vm799, %vm1060
      %vm1187 = vmand %vm800, %vm1061
      %vm1188 = vmand %vm801, %vm1061
      %vm1189 = vmand %vm802, %vm1061
      %vm1190 = vmand %vm803, %vm1062
      %vm1191 = vmand %vm804, %vm1062
      %vm1192 = vmand %vm805, %vm1062
      %vm1193 = vmand %vm806, %vm1063
      %vm1194 = vmand %vm807, %vm1063
      %vm1195 = vmand %vm808, %vm1063
      %vm1196 = vmand %vm809, %vm1064
      %vm1197 = vmand %vm810, %vm1064
      %vm1198 = vmand %vm811, %vm1064
      %vm1199 = vmand %vm812, %vm1065
      %vm1200 = vmand %vm813, %vm1065
      %vm1201 = vmand %vm814, %vm1065
      %vm1202 = vmand %vm815, %vm1066
      %vm1203 = vmand %vm816, %vm1066
      %vm1204 = vmand %vm817, %vm1066
      %vm1205 = vmand %vm818, %vm1067
      %vm1206 = vmand %vm819, %vm1067
      %vm1207 = vmand %vm820, %vm1067
      %vm1208 = vmand %vm821, %vm1068
      %vm1209 = vmand %vm822, %vm1068
      %vm1210 = vmand %vm823, %vm1068
      %vm1211 = vmand %vm824, %vm1069
      %vm1212 = vmand %vm825, %vm1069
      %vm1213 = vmand %vm826, %vm1069
      %vm1214 = vmand %vm827, %vm1070
      %vm1215 = vmand %vm828, %vm1070
      %vm1216 = vmand %vm829, %vm1070
      %vm1217 = vmand %vm830, %vm1071
      %vm1218 = vmand %vm831, %vm1071
      %vm1219 = vmand %vm832, %vm1071
      %vm1220 = vmand %vm833, %vm1072
      %vm1221 = vmand %vm834, %vm1072
      %vm1222 = vmand %vm835, %vm1072
      %vm1223 = vmand %vm836, %vm1073
      %vm1224 = vmand %vm837, %vm1073
      %vm1225 = vmand %vm838, %vm1073
      %vm1226 = vmand %vm839, %vm1074
      %vm1227 = vmand %vm840, %vm1074
      %vm1228 = vmand %vm841, %vm1074
      %vm1229 = vmand %vm842, %vm1075
      %vm1230 = vmand %vm843, %vm1075
      %vm1231 = vmand %vm844, %vm1075
      %vm1232 = vmand %vm845, %vm1076
      %vm1233 = vmand %vm846, %vm1076
      %vm1234 = vmand %vm847, %vm1076
      %vm1235 = vmand %vm848, %vm1077
      %vm1236 = vmand %vm849, %vm1077
      %vm1237 = vmand %vm850, %vm1077
      %vm1238 = vmand %vm851, %vm1078
      %vm1239 = vmand %vm852, %vm1078
      %vm1240 = vmand %vm853, %vm1078
      %vm1241 = vmand %vm854, %vm1079
      %vm1242 = vmand %vm855, %vm1079
      %vm1243 = vmand %vm856, %vm1079
      %vm1244 = vmand %vm857, %vm1080
      %vm1245 = vmand %vm858, %vm1080
      %vm1246 = vmand %vm859, %vm1080
      %vm1247 = vmand %vm860, %vm1081
      %vm1248 = vmand %vm861, %vm1081
      %vm1249 = vmand %vm862, %vm1081
      %vm1250 = vmand %vm863, %vm1082
      %vm1251 = vmand %vm864, %vm1082
      %vm1252 = vmand %vm865, %vm1082
      %vm1253 = vmand %vm866, %vm1083
      %vm1254 = vmand %vm867, %vm1083
      %vm1255 = vmand %vm868, %vm1083
      %vm1256 = vmand %vm869, %vm1084
      %vm1257 = vmand %vm870, %vm1084
      %vm1258 = vmand %vm871, %vm1084
      %vm1259 = vmand %vm872, %vm1085
      %vm1260 = vmand %vm873, %vm1085
      %vm1261 = vmand %vm874, %vm1085
      %vm1262 = vmand %vm875, %vm1086
      %vm1263 = vmand %vm876, %vm1086
      %vm1264 = vmand %vm877, %vm1086
      %vm1265 = vmand %vm878, %vm1087
      %vm1266 = vmand %vm879, %vm1087
      %vm1267 = vmand %vm880, %vm1087
      %vm1268 = vmand %vm881, %vm1088
      %vm1269 = vmand %vm882, %vm1088
      %vm1270 = vmand %vm883, %vm1088
      %vm1271 = vmand %vm884, %vm1089
      %vm1272 = vmand %vm885, %vm1089
      %vm1273 = vmand %vm886, %vm1089
      %vm1274 = vmand %vm887, %vm1090
      %vm1275 = vmand %vm888, %vm1090
      %vm1276 = vmand %vm889, %vm1090
      %vm1277 = vmand %vm890, %vm1091
      %vm1278 = vmand %vm891, %vm1091
      %vm1279 = vmand %vm892, %vm1091
      %vm1280 = vmand %vm893, %vm1092
      %vm1281 = vmand %vm894, %vm1092
      %vm1282 = vmand %vm895, %vm1092
      %vm1283 = vmand %vm896, %vm1093
      %vm1284 = vmand %vm897, %vm1093
      %vm1285 = vmand %vm898, %vm1093
      %v1286 = vsub.f32 %v323, %v515
      %v1287 = vsub.f32 %v324, %v516
      %v1288 = vsub.f32 %v325, %v517
      %v1289 = vsub.f32 %v326, %v518
      %v1290 = vsub.f32 %v327, %v519
      %v1291 = vsub.f32 %v328, %v520
      %v1292 = vsub.f32 %v329, %v521
      %v1293 = vsub.f32 %v330, %v522
      %v1294 = vsub.f32 %v331, %v523
      %v1295 = vsub.f32 %v332, %v524
      %v1296 = vsub.f32 %v333, %v525
      %v1297 = vsub.f32 %v334, %v526
      %v1298 = vsub.f32 %v335, %v527
      %v1299 = vsub.f32 %v336, %v528
      %v1300 = vsub.f32 %v337, %v529
      %v1301 = vsub.f32 %v338, %v530
      %v1302 = vsub.f32 %v339, %v531
      %v1303 = vsub.f32 %v340, %v532
      %v1304 = vsub.f32 %v341, %v533
      %v1305 = vsub.f32 %v342, %v534
      %v1306 = vsub.f32 %v343, %v535
      %v1307 = vsub.f32 %v344, %v536
      %v1308 = vsub.f32 %v345, %v537
      %v1309 = vsub.f32 %v346, %v538
      %v1310 = vsub.f32 %v347, %v539
      %v1311 = vsub.f32 %v348, %v540
      %v1312 = vsub.f32 %v349, %v541
      %v1313 = vsub.f32 %v350, %v542
      %v1314 = vsub.f32 %v351, %v543
      %v1315 = vsub.f32 %v352, %v544
      %v1316 = vsub.f32 %v353, %v545
      %v1317 = vsub.f32 %v354, %v546
      %v1318 = vsub.f32 %v355, %v547
      %v1319 = vsub.f32 %v356, %v548
      %v1320 = vsub.f32 %v357, %v549
      %v1321 = vsub.f32 %v358, %v550
      %v1322 = vsub.f32 %v359, %v551
      %v1323 = vsub.f32 %v360, %v552
      %v1324 = vsub.f32 %v361, %v553
      %v1325 = vsub.f32 %v362, %v554
      %v1326 = vsub.f32 %v363, %v555
      %v1327 = vsub.f32 %v364, %v556
      %v1328 = vsub.f32 %v365, %v557
      %v1329 = vsub.f32 %v366, %v558
      %v1330 = vsub.f32 %v367, %v559
      %v1331 = vsub.f32 %v368, %v560
      %v1332 = vsub.f32 %v369, %v561
      %v1333 = vsub.f32 %v370, %v562
      %v1334 = vsub.f32 %v371, %v563
      %v1335 = vsub.f32 %v372, %v564
      %v1336 = vsub.f32 %v373, %v565
      %v1337 = vsub.f32 %v374, %v566
      %v1338 = vsub.f32 %v375, %v567
      %v1339 = vsub.f32 %v376, %v568
      %v1340 = vsub.f32 %v377, %v569
      %v1341 = vsub.f32 %v378, %v570
      %v1342 = vsub.f32 %v379, %v571
      %v1343 = vsub.f32 %v380, %v572
      %v1344 = vsub.f32 %v381, %v573
      %v1345 = vsub.f32 %v382, %v574
      %v1346 = vsub.f32 %v383, %v575
      %v1347 = vsub.f32 %v384, %v576
      %v1348 = vsub.f32 %v385, %v577
      %v1349 = vsub.f32 %v386, %v578
      %v1350 = vsub.f32 %v387, %v579
      %v1351 = vsub.f32 %v388, %v580
      %v1352 = vsub.f32 %v389, %v581
      %v1353 = vsub.f32 %v390, %v582
      %v1354 = vsub.f32 %v391, %v583
      %v1355 = vsub.f32 %v392, %v584
      %v1356 = vsub.f32 %v393, %v585
      %v1357 = vsub.f32 %v394, %v586
      %v1358 = vsub.f32 %v395, %v587
      %v1359 = vsub.f32 %v396, %v588
      %v1360 = vsub.f32 %v397, %v589
      %v1361 = vsub.f32 %v398, %v590
      %v1362 = vsub.f32 %v399, %v591
      %v1363 = vsub.f32 %v400, %v592
      %v1364 = vsub.f32 %v401, %v593
      %v1365 = vsub.f32 %v402, %v594
      %v1366 = vsub.f32 %v403, %v595
      %v1367 = vsub.f32 %v404, %v596
      %v1368 = vsub.f32 %v405, %v597
      %v1369 = vsub.f32 %v406, %v598
      %v1370 = vsub.f32 %v407, %v599
      %v1371 = vsub.f32 %v408, %v600
      %v1372 = vsub.f32 %v409, %v601
      %v1373 = vsub.f32 %v410, %v602
      %v1374 = vsub.f32 %v411, %v603
      %v1375 = vsub.f32 %v412, %v604
      %v1376 = vsub.f32 %v413, %v605
      %v1377 = vsub.f32 %v414, %v606
      %v1378 = vsub.f32 %v415, %v607
      %v1379 = vsub.f32 %v416, %v608
      %v1380 = vsub.f32 %v417, %v609
      %v1381 = vsub.f32 %v418, %v610
      %v1382 = vsub.f32 %v419, %v611
      %v1383 = vsub.f32 %v420, %v612
      %v1384 = vsub.f32 %v421, %v613
      %v1385 = vsub.f32 %v422, %v614
      %v1386 = vsub.f32 %v423, %v615
      %v1387 = vsub.f32 %v424, %v616
      %v1388 = vsub.f32 %v425, %v617
      %v1389 = vsub.f32 %v426, %v618
      %v1390 = vsub.f32 %v427, %v619
      %v1391 = vsub.f32 %v428, %v620
      %v1392 = vsub.f32 %v429, %v621
      %v1393 = vsub.f32 %v430, %v622
      %v1394 = vsub.f32 %v431, %v623
      %v1395 = vsub.f32 %v432, %v624
      %v1396 = vsub.f32 %v433, %v625
      %v1397 = vsub.f32 %v434, %v626
      %v1398 = vsub.f32 %v435, %v627
      %v1399 = vsub.f32 %v436, %v628
      %v1400 = vsub.f32 %v437, %v629
      %v1401 = vsub.f32 %v438, %v630
      %v1402 = vsub.f32 %v439, %v631
      %v1403 = vsub.f32 %v440, %v632
      %v1404 = vsub.f32 %v441, %v633
      %v1405 = vsub.f32 %v442, %v634
      %v1406 = vsub.f32 %v443, %v635
      %v1407 = vsub.f32 %v444, %v636
      %v1408 = vsub.f32 %v445, %v637
      %v1409 = vsub.f32 %v446, %v638
      %v1410 = vsub.f32 %v447, %v639
      %v1411 = vsub.f32 %v448, %v640
      %v1412 = vsub.f32 %v449, %v641
      %v1413 = vsub.f32 %v450, %v642
      %v1414 = vsub.f32 %v451, %v643
      %v1415 = vsub.f32 %v452, %v644
      %v1416 = vsub.f32 %v453, %v645
      %v1417 = vsub.f32 %v454, %v646
      %v1418 = vsub.f32 %v455, %v647
      %v1419 = vsub.f32 %v456, %v648
      %v1420 = vsub.f32 %v457, %v649
      %v1421 = vsub.f32 %v458, %v650
      %v1422 = vsub.f32 %v459, %v651
      %v1423 = vsub.f32 %v460, %v652
      %v1424 = vsub.f32 %v461, %v653
      %v1425 = vsub.f32 %v462, %v654
      %v1426 = vsub.f32 %v463, %v655
      %v1427 = vsub.f32 %v464, %v656
      %v1428 = vsub.f32 %v465, %v657
      %v1429 = vsub.f32 %v466, %v658
      %v1430 = vsub.f32 %v467, %v659
      %v1431 = vsub.f32 %v468, %v660
      %v1432 = vsub.f32 %v469, %v661
      %v1433 = vsub.f32 %v470, %v662
      %v1434 = vsub.f32 %v471, %v663
      %v1435 = vsub.f32 %v472, %v664
      %v1436 = vsub.f32 %v473, %v665
      %v1437 = vsub.f32 %v474, %v666
      %v1438 = vsub.f32 %v475, %v667
      %v1439 = vsub.f32 %v476, %v668
      %v1440 = vsub.f32 %v477, %v669
      %v1441 = vsub.f32 %v478, %v670
      %v1442 = vsub.f32 %v479, %v671
      %v1443 = vsub.f32 %v480, %v672
      %v1444 = vsub.f32 %v481, %v673
      %v1445 = vsub.f32 %v482, %v674
      %v1446 = vsub.f32 %v483, %v675
      %v1447 = vsub.f32 %v484, %v676
      %v1448 = vsub.f32 %v485, %v677
      %v1449 = vsub.f32 %v486, %v678
      %v1450 = vsub.f32 %v487, %v679
      %v1451 = vsub.f32 %v488, %v680
      %v1452 = vsub.f32 %v489, %v681
      %v1453 = vsub.f32 %v490, %v682
      %v1454 = vsub.f32 %v491, %v683
      %v1455 = vsub.f32 %v492, %v684
      %v1456 = vsub.f32 %v493, %v685
      %v1457 = vsub.f32 %v494, %v686
      %v1458 = vsub.f32 %v495, %v687
      %v1459 = vsub.f32 %v496, %v688
      %v1460 = vsub.f32 %v497, %v689
      %v1461 = vsub.f32 %v498, %v690
      %v1462 = vsub.f32 %v499, %v691
      %v1463 = vsub.f32 %v500, %v692
      %v1464 = vsub.f32 %v501, %v693
      %v1465 = vsub.f32 %v502, %v694
      %v1466 = vsub.f32 %v503, %v695
      %v1467 = vsub.f32 %v504, %v696
      %v1468 = vsub.f32 %v505, %v697
      %v1469 = vsub.f32 %v506, %v698
      %v1470 = vsub.f32 %v507, %v699
      %v1471 = vsub.f32 %v508, %v700
      %v1472 = vsub.f32 %v509, %v701
      %v1473 = vsub.f32 %v510, %v702
      %v1474 = vsub.f32 %v511, %v703
      %v1475 = vsub.f32 %v512, %v704
      %v1476 = vsub.f32 %v513, %v705
      %v1477 = vsub.f32 %v514, %v706
      %v1478 = vmul.f32 %v1286, %v1286
      %v1479 = vmul.f32 %v1287, %v1287
      %v1480 = vmul.f32 %v1288, %v1288
      %v1481 = vmul.f32 %v1289, %v1289
      %v1482 = vmul.f32 %v1290, %v1290
      %v1483 = vmul.f32 %v1291, %v1291
      %v1484 = vmul.f32 %v1292, %v1292
      %v1485 = vmul.f32 %v1293, %v1293
      %v1486 = vmul.f32 %v1294, %v1294
      %v1487 = vmul.f32 %v1295, %v1295
      %v1488 = vmul.f32 %v1296, %v1296
      %v1489 = vmul.f32 %v1297, %v1297
      %v1490 = vmul.f32 %v1298, %v1298
      %v1491 = vmul.f32 %v1299, %v1299
      %v1492 = vmul.f32 %v1300, %v1300
      %v1493 = vmul.f32 %v1301, %v1301
      %v1494 = vmul.f32 %v1302, %v1302
      %v1495 = vmul.f32 %v1303, %v1303
      %v1496 = vmul.f32 %v1304, %v1304
      %v1497 = vmul.f32 %v1305, %v1305
      %v1498 = vmul.f32 %v1306, %v1306
      %v1499 = vmul.f32 %v1307, %v1307
      %v1500 = vmul.f32 %v1308, %v1308
      %v1501 = vmul.f32 %v1309, %v1309
      %v1502 = vmul.f32 %v1310, %v1310
      %v1503 = vmul.f32 %v1311, %v1311
      %v1504 = vmul.f32 %v1312, %v1312
      %v1505 = vmul.f32 %v1313, %v1313
      %v1506 = vmul.f32 %v1314, %v1314
      %v1507 = vmul.f32 %v1315, %v1315
      %v1508 = vmul.f32 %v1316, %v1316
      %v1509 = vmul.f32 %v1317, %v1317
      %v1510 = vmul.f32 %v1318, %v1318
      %v1511 = vmul.f32 %v1319, %v1319
      %v1512 = vmul.f32 %v1320, %v1320
      %v1513 = vmul.f32 %v1321, %v1321
      %v1514 = vmul.f32 %v1322, %v1322
      %v1515 = vmul.f32 %v1323, %v1323
      %v1516 = vmul.f32 %v1324, %v1324
      %v1517 = vmul.f32 %v1325, %v1325
      %v1518 = vmul.f32 %v1326, %v1326
      %v1519 = vmul.f32 %v1327, %v1327
      %v1520 = vmul.f32 %v1328, %v1328
      %v1521 = vmul.f32 %v1329, %v1329
      %v1522 = vmul.f32 %v1330, %v1330
      %v1523 = vmul.f32 %v1331, %v1331
      %v1524 = vmul.f32 %v1332, %v1332
      %v1525 = vmul.f32 %v1333, %v1333
      %v1526 = vmul.f32 %v1334, %v1334
      %v1527 = vmul.f32 %v1335, %v1335
      %v1528 = vmul.f32 %v1336, %v1336
      %v1529 = vmul.f32 %v1337, %v1337
      %v1530 = vmul.f32 %v1338, %v1338
      %v1531 = vmul.f32 %v1339, %v1339
      %v1532 = vmul.f32 %v1340, %v1340
      %v1533 = vmul.f32 %v1341, %v1341
      %v1534 = vmul.f32 %v1342, %v1342
      %v1535 = vmul.f32 %v1343, %v1343
      %v1536 = vmul.f32 %v1344, %v1344
      %v1537 = vmul.f32 %v1345, %v1345
      %v1538 = vmul.f32 %v1346, %v1346
      %v1539 = vmul.f32 %v1347, %v1347
      %v1540 = vmul.f32 %v1348, %v1348
      %v1541 = vmul.f32 %v1349, %v1349
      %v1542 = vmul.f32 %v1350, %v1350
      %v1543 = vmul.f32 %v1351, %v1351
      %v1544 = vmul.f32 %v1352, %v1352
      %v1545 = vmul.f32 %v1353, %v1353
      %v1546 = vmul.f32 %v1354, %v1354
      %v1547 = vmul.f32 %v1355, %v1355
      %v1548 = vmul.f32 %v1356, %v1356
      %v1549 = vmul.f32 %v1357, %v1357
      %v1550 = vmul.f32 %v1358, %v1358
      %v1551 = vmul.f32 %v1359, %v1359
      %v1552 = vmul.f32 %v1360, %v1360
      %v1553 = vmul.f32 %v1361, %v1361
      %v1554 = vmul.f32 %v1362, %v1362
      %v1555 = vmul.f32 %v1363, %v1363
      %v1556 = vmul.f32 %v1364, %v1364
      %v1557 = vmul.f32 %v1365, %v1365
      %v1558 = vmul.f32 %v1366, %v1366
      %v1559 = vmul.f32 %v1367, %v1367
      %v1560 = vmul.f32 %v1368, %v1368
      %v1561 = vmul.f32 %v1369, %v1369
      %v1562 = vmul.f32 %v1370, %v1370
      %v1563 = vmul.f32 %v1371, %v1371
      %v1564 = vmul.f32 %v1372, %v1372
      %v1565 = vmul.f32 %v1373, %v1373
      %v1566 = vmul.f32 %v1374, %v1374
      %v1567 = vmul.f32 %v1375, %v1375
      %v1568 = vmul.f32 %v1376, %v1376
      %v1569 = vmul.f32 %v1377, %v1377
      %v1570 = vmul.f32 %v1378, %v1378
      %v1571 = vmul.f32 %v1379, %v1379
      %v1572 = vmul.f32 %v1380, %v1380
      %v1573 = vmul.f32 %v1381, %v1381
      %v1574 = vmul.f32 %v1382, %v1382
      %v1575 = vmul.f32 %v1383, %v1383
      %v1576 = vmul.f32 %v1384, %v1384
      %v1577 = vmul.f32 %v1385, %v1385
      %v1578 = vmul.f32 %v1386, %v1386
      %v1579 = vmul.f32 %v1387, %v1387
      %v1580 = vmul.f32 %v1388, %v1388
      %v1581 = vmul.f32 %v1389, %v1389
      %v1582 = vmul.f32 %v1390, %v1390
      %v1583 = vmul.f32 %v1391, %v1391
      %v1584 = vmul.f32 %v1392, %v1392
      %v1585 = vmul.f32 %v1393, %v1393
      %v1586 = vmul.f32 %v1394, %v1394
      %v1587 = vmul.f32 %v1395, %v1395
      %v1588 = vmul.f32 %v1396, %v1396
      %v1589 = vmul.f32 %v1397, %v1397
      %v1590 = vmul.f32 %v1398, %v1398
      %v1591 = vmul.f32 %v1399, %v1399
      %v1592 = vmul.f32 %v1400, %v1400
      %v1593 = vmul.f32 %v1401, %v1401
      %v1594 = vmul.f32 %v1402, %v1402
      %v1595 = vmul.f32 %v1403, %v1403
      %v1596 = vmul.f32 %v1404, %v1404
      %v1597 = vmul.f32 %v1405, %v1405
      %v1598 = vmul.f32 %v1406, %v1406
      %v1599 = vmul.f32 %v1407, %v1407
      %v1600 = vmul.f32 %v1408, %v1408
      %v1601 = vmul.f32 %v1409, %v1409
      %v1602 = vmul.f32 %v1410, %v1410
      %v1603 = vmul.f32 %v1411, %v1411
      %v1604 = vmul.f32 %v1412, %v1412
      %v1605 = vmul.f32 %v1413, %v1413
      %v1606 = vmul.f32 %v1414, %v1414
      %v1607 = vmul.f32 %v1415, %v1415
      %v1608 = vmul.f32 %v1416, %v1416
      %v1609 = vmul.f32 %v1417, %v1417
      %v1610 = vmul.f32 %v1418, %v1418
      %v1611 = vmul.f32 %v1419, %v1419
      %v1612 = vmul.f32 %v1420, %v1420
      %v1613 = vmul.f32 %v1421, %v1421
      %v1614 = vmul.f32 %v1422, %v1422
      %v1615 = vmul.f32 %v1423, %v1423
      %v1616 = vmul.f32 %v1424, %v1424
      %v1617 = vmul.f32 %v1425, %v1425
      %v1618 = vmul.f32 %v1426, %v1426
      %v1619 = vmul.f32 %v1427, %v1427
      %v1620 = vmul.f32 %v1428, %v1428
      %v1621 = vmul.f32 %v1429, %v1429
      %v1622 = vmul.f32 %v1430, %v1430
      %v1623 = vmul.f32 %v1431, %v1431
      %v1624 = vmul.f32 %v1432, %v1432
      %v1625 = vmul.f32 %v1433, %v1433
      %v1626 = vmul.f32 %v1434, %v1434
      %v1627 = vmul.f32 %v1435, %v1435
      %v1628 = vmul.f32 %v1436, %v1436
      %v1629 = vmul.f32 %v1437, %v1437
      %v1630 = vmul.f32 %v1438, %v1438
      %v1631 = vmul.f32 %v1439, %v1439
      %v1632 = vmul.f32 %v1440, %v1440
      %v1633 = vmul.f32 %v1441, %v1441
      %v1634 = vmul.f32 %v1442, %v1442
      %v1635 = vmul.f32 %v1443, %v1443
      %v1636 = vmul.f32 %v1444, %v1444
      %v1637 = vmul.f32 %v1445, %v1445
      %v1638 = vmul.f32 %v1446, %v1446
      %v1639 = vmul.f32 %v1447, %v1447
      %v1640 = vmul.f32 %v1448, %v1448
      %v1641 = vmul.f32 %v1449, %v1449
      %v1642 = vmul.f32 %v1450, %v1450
      %v1643 = vmul.f32 %v1451, %v1451
      %v1644 = vmul.f32 %v1452, %v1452
      %v1645 = vmul.f32 %v1453, %v1453
      %v1646 = vmul.f32 %v1454, %v1454
      %v1647 = vmul.f32 %v1455, %v1455
      %v1648 = vmul.f32 %v1456, %v1456
      %v1649 = vmul.f32 %v1457, %v1457
      %v1650 = vmul.f32 %v1458, %v1458
      %v1651 = vmul.f32 %v1459, %v1459
      %v1652 = vmul.f32 %v1460, %v1460
      %v1653 = vmul.f32 %v1461, %v1461
      %v1654 = vmul.f32 %v1462, %v1462
      %v1655 = vmul.f32 %v1463, %v1463
      %v1656 = vmul.f32 %v1464, %v1464
      %v1657 = vmul.f32 %v1465, %v1465
      %v1658 = vmul.f32 %v1466, %v1466
      %v1659 = vmul.f32 %v1467, %v1467
      %v1660 = vmul.f32 %v1468, %v1468
      %v1661 = vmul.f32 %v1469, %v1469
      %v1662 = vmul.f32 %v1470, %v1470
      %v1663 = vmul.f32 %v1471, %v1471
      %v1664 = vmul.f32 %v1472, %v1472
      %v1665 = vmul.f32 %v1473, %v1473
      %v1666 = vmul.f32 %v1474, %v1474
      %v1667 = vmul.f32 %v1475, %v1475
      %v1668 = vmul.f32 %v1476, %v1476
      %v1669 = vmul.f32 %v1477, %v1477
      %v1670 = vsel %vm1094, %v1478, 0.0
      %v1671 = vsel %vm1095, %v1479, 0.0
      %v1672 = vsel %vm1096, %v1480, 0.0
      %v1673 = vsel %vm1097, %v1481, 0.0
      %v1674 = vsel %vm1098, %v1482, 0.0
      %v1675 = vsel %vm1099, %v1483, 0.0
      %v1676 = vsel %vm1100, %v1484, 0.0
      %v1677 = vsel %vm1101, %v1485, 0.0
      %v1678 = vsel %vm1102, %v1486, 0.0
      %v1679 = vsel %vm1103, %v1487, 0.0
      %v1680 = vsel %vm1104, %v1488, 0.0
      %v1681 = vsel %vm1105, %v1489, 0.0
      %v1682 = vsel %vm1106, %v1490, 0.0
      %v1683 = vsel %vm1107, %v1491, 0.0
      %v1684 = vsel %vm1108, %v1492, 0.0
      %v1685 = vsel %vm1109, %v1493, 0.0
      %v1686 = vsel %vm1110, %v1494, 0.0
      %v1687 = vsel %vm1111, %v1495, 0.0
      %v1688 = vsel %vm1112, %v1496, 0.0
      %v1689 = vsel %vm1113, %v1497, 0.0
      %v1690 = vsel %vm1114, %v1498, 0.0
      %v1691 = vsel %vm1115, %v1499, 0.0
      %v1692 = vsel %vm1116, %v1500, 0.0
      %v1693 = vsel %vm1117, %v1501, 0.0
      %v1694 = vsel %vm1118, %v1502, 0.0
      %v1695 = vsel %vm1119, %v1503, 0.0
      %v1696 = vsel %vm1120, %v1504, 0.0
      %v1697 = vsel %vm1121, %v1505, 0.0
      %v1698 = vsel %vm1122, %v1506, 0.0
      %v1699 = vsel %vm1123, %v1507, 0.0
      %v1700 = vsel %vm1124, %v1508, 0.0
      %v1701 = vsel %vm1125, %v1509, 0.0
      %v1702 = vsel %vm1126, %v1510, 0.0
      %v1703 = vsel %vm1127, %v1511, 0.0
      %v1704 = vsel %vm1128, %v1512, 0.0
      %v1705 = vsel %vm1129, %v1513, 0.0
      %v1706 = vsel %vm1130, %v1514, 0.0
      %v1707 = vsel %vm1131, %v1515, 0.0
      %v1708 = vsel %vm1132, %v1516, 0.0
      %v1709 = vsel %vm1133, %v1517, 0.0
      %v1710 = vsel %vm1134, %v1518, 0.0
      %v1711 = vsel %vm1135, %v1519, 0.0
      %v1712 = vsel %vm1136, %v1520, 0.0
      %v1713 = vsel %vm1137, %v1521, 0.0
      %v1714 = vsel %vm1138, %v1522, 0.0
      %v1715 = vsel %vm1139, %v1523, 0.0
      %v1716 = vsel %vm1140, %v1524, 0.0
      %v1717 = vsel %vm1141, %v1525, 0.0
      %v1718 = vsel %vm1142, %v1526, 0.0
      %v1719 = vsel %vm1143, %v1527, 0.0
      %v1720 = vsel %vm1144, %v1528, 0.0
      %v1721 = vsel %vm1145, %v1529, 0.0
      %v1722 = vsel %vm1146, %v1530, 0.0
      %v1723 = vsel %vm1147, %v1531, 0.0
      %v1724 = vsel %vm1148, %v1532, 0.0
      %v1725 = vsel %vm1149, %v1533, 0.0
      %v1726 = vsel %vm1150, %v1534, 0.0
      %v1727 = vsel %vm1151, %v1535, 0.0
      %v1728 = vsel %vm1152, %v1536, 0.0
      %v1729 = vsel %vm1153, %v1537, 0.0
      %v1730 = vsel %vm1154, %v1538, 0.0
      %v1731 = vsel %vm1155, %v1539, 0.0
      %v1732 = vsel %vm1156, %v1540, 0.0
      %v1733 = vsel %vm1157, %v1541, 0.0
      %v1734 = vsel %vm1158, %v1542, 0.0
      %v1735 = vsel %vm1159, %v1543, 0.0
      %v1736 = vsel %vm1160, %v1544, 0.0
      %v1737 = vsel %vm1161, %v1545, 0.0
      %v1738 = vsel %vm1162, %v1546, 0.0
      %v1739 = vsel %vm1163, %v1547, 0.0
      %v1740 = vsel %vm1164, %v1548, 0.0
      %v1741 = vsel %vm1165, %v1549, 0.0
      %v1742 = vsel %vm1166, %v1550, 0.0
      %v1743 = vsel %vm1167, %v1551, 0.0
      %v1744 = vsel %vm1168, %v1552, 0.0
      %v1745 = vsel %vm1169, %v1553, 0.0
      %v1746 = vsel %vm1170, %v1554, 0.0
      %v1747 = vsel %vm1171, %v1555, 0.0
      %v1748 = vsel %vm1172, %v1556, 0.0
      %v1749 = vsel %vm1173, %v1557, 0.0
      %v1750 = vsel %vm1174, %v1558, 0.0
      %v1751 = vsel %vm1175, %v1559, 0.0
      %v1752 = vsel %vm1176, %v1560, 0.0
      %v1753 = vsel %vm1177, %v1561, 0.0
      %v1754 = vsel %vm1178, %v1562, 0.0
      %v1755 = vsel %vm1179, %v1563, 0.0
      %v1756 = vsel %vm1180, %v1564, 0.0
      %v1757 = vsel %vm1181, %v1565, 0.0
      %v1758 = vsel %vm1182, %v1566, 0.0
      %v1759 = vsel %vm1183, %v1567, 0.0
      %v1760 = vsel %vm1184, %v1568, 0.0
      %v1761 = vsel %vm1185, %v1569, 0.0
      %v1762 = vsel %vm1186, %v1570, 0.0
      %v1763 = vsel %vm1187, %v1571, 0.0
      %v1764 = vsel %vm1188, %v1572, 0.0
      %v1765 = vsel %vm1189, %v1573, 0.0
      %v1766 = vsel %vm1190, %v1574, 0.0
      %v1767 = vsel %vm1191, %v1575, 0.0
      %v1768 = vsel %vm1192, %v1576, 0.0
      %v1769 = vsel %vm1193, %v1577, 0.0
      %v1770 = vsel %vm1194, %v1578, 0.0
      %v1771 = vsel %vm1195, %v1579, 0.0
      %v1772 = vsel %vm1196, %v1580, 0.0
      %v1773 = vsel %vm1197, %v1581, 0.0
      %v1774 = vsel %vm1198, %v1582, 0.0
      %v1775 = vsel %vm1199, %v1583, 0.0
      %v1776 = vsel %vm1200, %v1584, 0.0
      %v1777 = vsel %vm1201, %v1585, 0.0
      %v1778 = vsel %vm1202, %v1586, 0.0
      %v1779 = vsel %vm1203, %v1587, 0.0
      %v1780 = vsel %vm1204, %v1588, 0.0
      %v1781 = vsel %vm1205, %v1589, 0.0
      %v1782 = vsel %vm1206, %v1590, 0.0
      %v1783 = vsel %vm1207, %v1591, 0.0
      %v1784 = vsel %vm1208, %v1592, 0.0
      %v1785 = vsel %vm1209, %v1593, 0.0
      %v1786 = vsel %vm1210, %v1594, 0.0
      %v1787 = vsel %vm1211, %v1595, 0.0
      %v1788 = vsel %vm1212, %v1596, 0.0
      %v1789 = vsel %vm1213, %v1597, 0.0
      %v1790 = vsel %vm1214, %v1598, 0.0
      %v1791 = vsel %vm1215, %v1599, 0.0
      %v1792 = vsel %vm1216, %v1600, 0.0
      %v1793 = vsel %vm1217, %v1601, 0.0
      %v1794 = vsel %vm1218, %v1602, 0.0
      %v1795 = vsel %vm1219, %v1603, 0.0
      %v1796 = vsel %vm1220, %v1604, 0.0
      %v1797 = vsel %vm1221, %v1605, 0.0
      %v1798 = vsel %vm1222, %v1606, 0.0
      %v1799 = vsel %vm1223, %v1607, 0.0
      %v1800 = vsel %vm1224, %v1608, 0.0
      %v1801 = vsel %vm1225, %v1609, 0.0
      %v1802 = vsel %vm1226, %v1610, 0.0
      %v1803 = vsel %vm1227, %v1611, 0.0
      %v1804 = vsel %vm1228, %v1612, 0.0
      %v1805 = vsel %vm1229, %v1613, 0.0
      %v1806 = vsel %vm1230, %v1614, 0.0
      %v1807 = vsel %vm1231, %v1615, 0.0
      %v1808 = vsel %vm1232, %v1616, 0.0
      %v1809 = vsel %vm1233, %v1617, 0.0
      %v1810 = vsel %vm1234, %v1618, 0.0
      %v1811 = vsel %vm1235, %v1619, 0.0
      %v1812 = vsel %vm1236, %v1620, 0.0
      %v1813 = vsel %vm1237, %v1621, 0.0
      %v1814 = vsel %vm1238, %v1622, 0.0
      %v1815 = vsel %vm1239, %v1623, 0.0
      %v1816 = vsel %vm1240, %v1624, 0.0
      %v1817 = vsel %vm1241, %v1625, 0.0
      %v1818 = vsel %vm1242, %v1626, 0.0
      %v1819 = vsel %vm1243, %v1627, 0.0
      %v1820 = vsel %vm1244, %v1628, 0.0
      %v1821 = vsel %vm1245, %v1629, 0.0
      %v1822 = vsel %vm1246, %v1630, 0.0
      %v1823 = vsel %vm1247, %v1631, 0.0
      %v1824 = vsel %vm1248, %v1632, 0.0
      %v1825 = vsel %vm1249, %v1633, 0.0
      %v1826 = vsel %vm1250, %v1634, 0.0
      %v1827 = vsel %vm1251, %v1635, 0.0
      %v1828 = vsel %vm1252, %v1636, 0.0
      %v1829 = vsel %vm1253, %v1637, 0.0
      %v1830 = vsel %vm1254, %v1638, 0.0
      %v1831 = vsel %vm1255, %v1639, 0.0
      %v1832 = vsel %vm1256, %v1640, 0.0
      %v1833 = vsel %vm1257, %v1641, 0.0
      %v1834 = vsel %vm1258, %v1642, 0.0
      %v1835 = vsel %vm1259, %v1643, 0.0
      %v1836 = vsel %vm1260, %v1644, 0.0
      %v1837 = vsel %vm1261, %v1645, 0.0
      %v1838 = vsel %vm1262, %v1646, 0.0
      %v1839 = vsel %vm1263, %v1647, 0.0
      %v1840 = vsel %vm1264, %v1648, 0.0
      %v1841 = vsel %vm1265, %v1649, 0.0
      %v1842 = vsel %vm1266, %v1650, 0.0
      %v1843 = vsel %vm1267, %v1651, 0.0
      %v1844 = vsel %vm1268, %v1652, 0.0
      %v1845 = vsel %vm1269, %v1653, 0.0
      %v1846 = vsel %vm1270, %v1654, 0.0
      %v1847 = vsel %vm1271, %v1655, 0.0
      %v1848 = vsel %vm1272, %v1656, 0.0
      %v1849 = vsel %vm1273, %v1657, 0.0
      %v1850 = vsel %vm1274, %v1658, 0.0
      %v1851 = vsel %vm1275, %v1659, 0.0
      %v1852 = vsel %vm1276, %v1660, 0.0
      %v1853 = vsel %vm1277, %v1661, 0.0
      %v1854 = vsel %vm1278, %v1662, 0.0
      %v1855 = vsel %vm1279, %v1663, 0.0
      %v1856 = vsel %vm1280, %v1664, 0.0
      %v1857 = vsel %vm1281, %v1665, 0.0
      %v1858 = vsel %vm1282, %v1666, 0.0
      %v1859 = vsel %vm1283, %v1667, 0.0
      %v1860 = vsel %vm1284, %v1668, 0.0
      %v1861 = vsel %vm1285, %v1669, 0.0
      %v1862 = vsel %vm1094, 1, 0
      %v1863 = vsel %vm1095, 1, 0
      %v1864 = vsel %vm1096, 1, 0
      %v1865 = vsel %vm1097, 1, 0
      %v1866 = vsel %vm1098, 1, 0
      %v1867 = vsel %vm1099, 1, 0
      %v1868 = vsel %vm1100, 1, 0
      %v1869 = vsel %vm1101, 1, 0
      %v1870 = vsel %vm1102, 1, 0
      %v1871 = vsel %vm1103, 1, 0
      %v1872 = vsel %vm1104, 1, 0
      %v1873 = vsel %vm1105, 1, 0
      %v1874 = vsel %vm1106, 1, 0
      %v1875 = vsel %vm1107, 1, 0
      %v1876 = vsel %vm1108, 1, 0
      %v1877 = vsel %vm1109, 1, 0
      %v1878 = vsel %vm1110, 1, 0
      %v1879 = vsel %vm1111, 1, 0
      %v1880 = vsel %vm1112, 1, 0
      %v1881 = vsel %vm1113, 1, 0
      %v1882 = vsel %vm1114, 1, 0
      %v1883 = vsel %vm1115, 1, 0
      %v1884 = vsel %vm1116, 1, 0
      %v1885 = vsel %vm1117, 1, 0
      %v1886 = vsel %vm1118, 1, 0
      %v1887 = vsel %vm1119, 1, 0
      %v1888 = vsel %vm1120, 1, 0
      %v1889 = vsel %vm1121, 1, 0
      %v1890 = vsel %vm1122, 1, 0
      %v1891 = vsel %vm1123, 1, 0
      %v1892 = vsel %vm1124, 1, 0
      %v1893 = vsel %vm1125, 1, 0
      %v1894 = vsel %vm1126, 1, 0
      %v1895 = vsel %vm1127, 1, 0
      %v1896 = vsel %vm1128, 1, 0
      %v1897 = vsel %vm1129, 1, 0
      %v1898 = vsel %vm1130, 1, 0
      %v1899 = vsel %vm1131, 1, 0
      %v1900 = vsel %vm1132, 1, 0
      %v1901 = vsel %vm1133, 1, 0
      %v1902 = vsel %vm1134, 1, 0
      %v1903 = vsel %vm1135, 1, 0
      %v1904 = vsel %vm1136, 1, 0
      %v1905 = vsel %vm1137, 1, 0
      %v1906 = vsel %vm1138, 1, 0
      %v1907 = vsel %vm1139, 1, 0
      %v1908 = vsel %vm1140, 1, 0
      %v1909 = vsel %vm1141, 1, 0
      %v1910 = vsel %vm1142, 1, 0
      %v1911 = vsel %vm1143, 1, 0
      %v1912 = vsel %vm1144, 1, 0
      %v1913 = vsel %vm1145, 1, 0
      %v1914 = vsel %vm1146, 1, 0
      %v1915 = vsel %vm1147, 1, 0
      %v1916 = vsel %vm1148, 1, 0
      %v1917 = vsel %vm1149, 1, 0
      %v1918 = vsel %vm1150, 1, 0
      %v1919 = vsel %vm1151, 1, 0
      %v1920 = vsel %vm1152, 1, 0
      %v1921 = vsel %vm1153, 1, 0
      %v1922 = vsel %vm1154, 1, 0
      %v1923 = vsel %vm1155, 1, 0
      %v1924 = vsel %vm1156, 1, 0
      %v1925 = vsel %vm1157, 1, 0
      %v1926 = vsel %vm1158, 1, 0
      %v1927 = vsel %vm1159, 1, 0
      %v1928 = vsel %vm1160, 1, 0
      %v1929 = vsel %vm1161, 1, 0
      %v1930 = vsel %vm1162, 1, 0
      %v1931 = vsel %vm1163, 1, 0
      %v1932 = vsel %vm1164, 1, 0
      %v1933 = vsel %vm1165, 1, 0
      %v1934 = vsel %vm1166, 1, 0
      %v1935 = vsel %vm1167, 1, 0
      %v1936 = vsel %vm1168, 1, 0
      %v1937 = vsel %vm1169, 1, 0
      %v1938 = vsel %vm1170, 1, 0
      %v1939 = vsel %vm1171, 1, 0
      %v1940 = vsel %vm1172, 1, 0
      %v1941 = vsel %vm1173, 1, 0
      %v1942 = vsel %vm1174, 1, 0
      %v1943 = vsel %vm1175, 1, 0
      %v1944 = vsel %vm1176, 1, 0
      %v1945 = vsel %vm1177, 1, 0
      %v1946 = vsel %vm1178, 1, 0
      %v1947 = vsel %vm1179, 1, 0
      %v1948 = vsel %vm1180, 1, 0
      %v1949 = vsel %vm1181, 1, 0
      %v1950 = vsel %vm1182, 1, 0
      %v1951 = vsel %vm1183, 1, 0
      %v1952 = vsel %vm1184, 1, 0
      %v1953 = vsel %vm1185, 1, 0
      %v1954 = vsel %vm1186, 1, 0
      %v1955 = vsel %vm1187, 1, 0
      %v1956 = vsel %vm1188, 1, 0
      %v1957 = vsel %vm1189, 1, 0
      %v1958 = vsel %vm1190, 1, 0
      %v1959 = vsel %vm1191, 1, 0
      %v1960 = vsel %vm1192, 1, 0
      %v1961 = vsel %vm1193, 1, 0
      %v1962 = vsel %vm1194, 1, 0
      %v1963 = vsel %vm1195, 1, 0
      %v1964 = vsel %vm1196, 1, 0
      %v1965 = vsel %vm1197, 1, 0
      %v1966 = vsel %vm1198, 1, 0
      %v1967 = vsel %vm1199, 1, 0
      %v1968 = vsel %vm1200, 1, 0
      %v1969 = vsel %vm1201, 1, 0
      %v1970 = vsel %vm1202, 1, 0
      %v1971 = vsel %vm1203, 1, 0
      %v1972 = vsel %vm1204, 1, 0
      %v1973 = vsel %vm1205, 1, 0
      %v1974 = vsel %vm1206, 1, 0
      %v1975 = vsel %vm1207, 1, 0
      %v1976 = vsel %vm1208, 1, 0
      %v1977 = vsel %vm1209, 1, 0
      %v1978 = vsel %vm1210, 1, 0
      %v1979 = vsel %vm1211, 1, 0
      %v1980 = vsel %vm1212, 1, 0
      %v1981 = vsel %vm1213, 1, 0
      %v1982 = vsel %vm1214, 1, 0
      %v1983 = vsel %vm1215, 1, 0
      %v1984 = vsel %vm1216, 1, 0
      %v1985 = vsel %vm1217, 1, 0
      %v1986 = vsel %vm1218, 1, 0
      %v1987 = vsel %vm1219, 1, 0
      %v1988 = vsel %vm1220, 1, 0
      %v1989 = vsel %vm1221, 1, 0
      %v1990 = vsel %vm1222, 1, 0
      %v1991 = vsel %vm1223, 1, 0
      %v1992 = vsel %vm1224, 1, 0
      %v1993 = vsel %vm1225, 1, 0
      %v1994 = vsel %vm1226, 1, 0
      %v1995 = vsel %vm1227, 1, 0
      %v1996 = vsel %vm1228, 1, 0
      %v1997 = vsel %vm1229, 1, 0
      %v1998 = vsel %vm1230, 1, 0
      %v1999 = vsel %vm1231, 1, 0
      %v2000 = vsel %vm1232, 1, 0
      %v2001 = vsel %vm1233, 1, 0
      %v2002 = vsel %vm1234, 1, 0
      %v2003 = vsel %vm1235, 1, 0
      %v2004 = vsel %vm1236, 1, 0
      %v2005 = vsel %vm1237, 1, 0
      %v2006 = vsel %vm1238, 1, 0
      %v2007 = vsel %vm1239, 1, 0
      %v2008 = vsel %vm1240, 1, 0
      %v2009 = vsel %vm1241, 1, 0
      %v2010 = vsel %vm1242, 1, 0
      %v2011 = vsel %vm1243, 1, 0
      %v2012 = vsel %vm1244, 1, 0
      %v2013 = vsel %vm1245, 1, 0
      %v2014 = vsel %vm1246, 1, 0
      %v2015 = vsel %vm1247, 1, 0
      %v2016 = vsel %vm1248, 1, 0
      %v2017 = vsel %vm1249, 1, 0
      %v2018 = vsel %vm1250, 1, 0
      %v2019 = vsel %vm1251, 1, 0
      %v2020 = vsel %vm1252, 1, 0
      %v2021 = vsel %vm1253, 1, 0
      %v2022 = vsel %vm1254, 1, 0
      %v2023 = vsel %vm1255, 1, 0
      %v2024 = vsel %vm1256, 1, 0
      %v2025 = vsel %vm1257, 1, 0
      %v2026 = vsel %vm1258, 1, 0
      %v2027 = vsel %vm1259, 1, 0
      %v2028 = vsel %vm1260, 1, 0
      %v2029 = vsel %vm1261, 1, 0
      %v2030 = vsel %vm1262, 1, 0
      %v2031 = vsel %vm1263, 1, 0
      %v2032 = vsel %vm1264, 1, 0
      %v2033 = vsel %vm1265, 1, 0
      %v2034 = vsel %vm1266, 1, 0
      %v2035 = vsel %vm1267, 1, 0
      %v2036 = vsel %vm1268, 1, 0
      %v2037 = vsel %vm1269, 1, 0
      %v2038 = vsel %vm1270, 1, 0
      %v2039 = vsel %vm1271, 1, 0
      %v2040 = vsel %vm1272, 1, 0
      %v2041 = vsel %vm1273, 1, 0
      %v2042 = vsel %vm1274, 1, 0
      %v2043 = vsel %vm1275, 1, 0
      %v2044 = vsel %vm1276, 1, 0
      %v2045 = vsel %vm1277, 1, 0
      %v2046 = vsel %vm1278, 1, 0
      %v2047 = vsel %vm1279, 1, 0
      %v2048 = vsel %vm1280, 1, 0
      %v2049 = vsel %vm1281, 1, 0
      %v2050 = vsel %vm1282, 1, 0
      %v2051 = vsel %vm1283, 1, 0
      %v2052 = vsel %vm1284, 1, 0
      %v2053 = vsel %vm1285, 1, 0
      %v2054 = vcvt.s32.f32 %v1862
      %v2055 = vcvt.s32.f32 %v1863
      %v2056 = vcvt.s32.f32 %v1864
      %v2057 = vcvt.s32.f32 %v1865
      %v2058 = vcvt.s32.f32 %v1866
      %v2059 = vcvt.s32.f32 %v1867
      %v2060 = vcvt.s32.f32 %v1868
      %v2061 = vcvt.s32.f32 %v1869
      %v2062 = vcvt.s32.f32 %v1870
      %v2063 = vcvt.s32.f32 %v1871
      %v2064 = vcvt.s32.f32 %v1872
      %v2065 = vcvt.s32.f32 %v1873
      %v2066 = vcvt.s32.f32 %v1874
      %v2067 = vcvt.s32.f32 %v1875
      %v2068 = vcvt.s32.f32 %v1876
      %v2069 = vcvt.s32.f32 %v1877
      %v2070 = vcvt.s32.f32 %v1878
      %v2071 = vcvt.s32.f32 %v1879
      %v2072 = vcvt.s32.f32 %v1880
      %v2073 = vcvt.s32.f32 %v1881
      %v2074 = vcvt.s32.f32 %v1882
      %v2075 = vcvt.s32.f32 %v1883
      %v2076 = vcvt.s32.f32 %v1884
      %v2077 = vcvt.s32.f32 %v1885
      %v2078 = vcvt.s32.f32 %v1886
      %v2079 = vcvt.s32.f32 %v1887
      %v2080 = vcvt.s32.f32 %v1888
      %v2081 = vcvt.s32.f32 %v1889
      %v2082 = vcvt.s32.f32 %v1890
      %v2083 = vcvt.s32.f32 %v1891
      %v2084 = vcvt.s32.f32 %v1892
      %v2085 = vcvt.s32.f32 %v1893
      %v2086 = vcvt.s32.f32 %v1894
      %v2087 = vcvt.s32.f32 %v1895
      %v2088 = vcvt.s32.f32 %v1896
      %v2089 = vcvt.s32.f32 %v1897
      %v2090 = vcvt.s32.f32 %v1898
      %v2091 = vcvt.s32.f32 %v1899
      %v2092 = vcvt.s32.f32 %v1900
      %v2093 = vcvt.s32.f32 %v1901
      %v2094 = vcvt.s32.f32 %v1902
      %v2095 = vcvt.s32.f32 %v1903
      %v2096 = vcvt.s32.f32 %v1904
      %v2097 = vcvt.s32.f32 %v1905
      %v2098 = vcvt.s32.f32 %v1906
      %v2099 = vcvt.s32.f32 %v1907
      %v2100 = vcvt.s32.f32 %v1908
      %v2101 = vcvt.s32.f32 %v1909
      %v2102 = vcvt.s32.f32 %v1910
      %v2103 = vcvt.s32.f32 %v1911
      %v2104 = vcvt.s32.f32 %v1912
      %v2105 = vcvt.s32.f32 %v1913
      %v2106 = vcvt.s32.f32 %v1914
      %v2107 = vcvt.s32.f32 %v1915
      %v2108 = vcvt.s32.f32 %v1916
      %v2109 = vcvt.s32.f32 %v1917
      %v2110 = vcvt.s32.f32 %v1918
      %v2111 = vcvt.s32.f32 %v1919
      %v2112 = vcvt.s32.f32 %v1920
      %v2113 = vcvt.s32.f32 %v1921
      %v2114 = vcvt.s32.f32 %v1922
      %v2115 = vcvt.s32.f32 %v1923
      %v2116 = vcvt.s32.f32 %v1924
      %v2117 = vcvt.s32.f32 %v1925
      %v2118 = vcvt.s32.f32 %v1926
      %v2119 = vcvt.s32.f32 %v1927
      %v2120 = vcvt.s32.f32 %v1928
      %v2121 = vcvt.s32.f32 %v1929
      %v2122 = vcvt.s32.f32 %v1930
      %v2123 = vcvt.s32.f32 %v1931
      %v2124 = vcvt.s32.f32 %v1932
      %v2125 = vcvt.s32.f32 %v1933
      %v2126 = vcvt.s32.f32 %v1934
      %v2127 = vcvt.s32.f32 %v1935
      %v2128 = vcvt.s32.f32 %v1936
      %v2129 = vcvt.s32.f32 %v1937
      %v2130 = vcvt.s32.f32 %v1938
      %v2131 = vcvt.s32.f32 %v1939
      %v2132 = vcvt.s32.f32 %v1940
      %v2133 = vcvt.s32.f32 %v1941
      %v2134 = vcvt.s32.f32 %v1942
      %v2135 = vcvt.s32.f32 %v1943
      %v2136 = vcvt.s32.f32 %v1944
      %v2137 = vcvt.s32.f32 %v1945
      %v2138 = vcvt.s32.f32 %v1946
      %v2139 = vcvt.s32.f32 %v1947
      %v2140 = vcvt.s32.f32 %v1948
      %v2141 = vcvt.s32.f32 %v1949
      %v2142 = vcvt.s32.f32 %v1950
      %v2143 = vcvt.s32.f32 %v1951
      %v2144 = vcvt.s32.f32 %v1952
      %v2145 = vcvt.s32.f32 %v1953
      %v2146 = vcvt.s32.f32 %v1954
      %v2147 = vcvt.s32.f32 %v1955
      %v2148 = vcvt.s32.f32 %v1956
      %v2149 = vcvt.s32.f32 %v1957
      %v2150 = vcvt.s32.f32 %v1958
      %v2151 = vcvt.s32.f32 %v1959
      %v2152 = vcvt.s32.f32 %v1960
      %v2153 = vcvt.s32.f32 %v1961
      %v2154 = vcvt.s32.f32 %v1962
      %v2155 = vcvt.s32.f32 %v1963
      %v2156 = vcvt.s32.f32 %v1964
      %v2157 = vcvt.s32.f32 %v1965
      %v2158 = vcvt.s32.f32 %v1966
      %v2159 = vcvt.s32.f32 %v1967
      %v2160 = vcvt.s32.f32 %v1968
      %v2161 = vcvt.s32.f32 %v1969
      %v2162 = vcvt.s32.f32 %v1970
      %v2163 = vcvt.s32.f32 %v1971
      %v2164 = vcvt.s32.f32 %v1972
      %v2165 = vcvt.s32.f32 %v1973
      %v2166 = vcvt.s32.f32 %v1974
      %v2167 = vcvt.s32.f32 %v1975
      %v2168 = vcvt.s32.f32 %v1976
      %v2169 = vcvt.s32.f32 %v1977
      %v2170 = vcvt.s32.f32 %v1978
      %v2171 = vcvt.s32.f32 %v1979
      %v2172 = vcvt.s32.f32 %v1980
      %v2173 = vcvt.s32.f32 %v1981
      %v2174 = vcvt.s32.f32 %v1982
      %v2175 = vcvt.s32.f32 %v1983
      %v2176 = vcvt.s32.f32 %v1984
      %v2177 = vcvt.s32.f32 %v1985
      %v2178 = vcvt.s32.f32 %v1986
      %v2179 = vcvt.s32.f32 %v1987
      %v2180 = vcvt.s32.f32 %v1988
      %v2181 = vcvt.s32.f32 %v1989
      %v2182 = vcvt.s32.f32 %v1990
      %v2183 = vcvt.s32.f32 %v1991
      %v2184 = vcvt.s32.f32 %v1992
      %v2185 = vcvt.s32.f32 %v1993
      %v2186 = vcvt.s32.f32 %v1994
      %v2187 = vcvt.s32.f32 %v1995
      %v2188 = vcvt.s32.f32 %v1996
      %v2189 = vcvt.s32.f32 %v1997
      %v2190 = vcvt.s32.f32 %v1998
      %v2191 = vcvt.s32.f32 %v1999
      %v2192 = vcvt.s32.f32 %v2000
      %v2193 = vcvt.s32.f32 %v2001
      %v2194 = vcvt.s32.f32 %v2002
      %v2195 = vcvt.s32.f32 %v2003
      %v2196 = vcvt.s32.f32 %v2004
      %v2197 = vcvt.s32.f32 %v2005
      %v2198 = vcvt.s32.f32 %v2006
      %v2199 = vcvt.s32.f32 %v2007
      %v2200 = vcvt.s32.f32 %v2008
      %v2201 = vcvt.s32.f32 %v2009
      %v2202 = vcvt.s32.f32 %v2010
      %v2203 = vcvt.s32.f32 %v2011
      %v2204 = vcvt.s32.f32 %v2012
      %v2205 = vcvt.s32.f32 %v2013
      %v2206 = vcvt.s32.f32 %v2014
      %v2207 = vcvt.s32.f32 %v2015
      %v2208 = vcvt.s32.f32 %v2016
      %v2209 = vcvt.s32.f32 %v2017
      %v2210 = vcvt.s32.f32 %v2018
      %v2211 = vcvt.s32.f32 %v2019
      %v2212 = vcvt.s32.f32 %v2020
      %v2213 = vcvt.s32.f32 %v2021
      %v2214 = vcvt.s32.f32 %v2022
      %v2215 = vcvt.s32.f32 %v2023
      %v2216 = vcvt.s32.f32 %v2024
      %v2217 = vcvt.s32.f32 %v2025
      %v2218 = vcvt.s32.f32 %v2026
      %v2219 = vcvt.s32.f32 %v2027
      %v2220 = vcvt.s32.f32 %v2028
      %v2221 = vcvt.s32.f32 %v2029
      %v2222 = vcvt.s32.f32 %v2030
      %v2223 = vcvt.s32.f32 %v2031
      %v2224 = vcvt.s32.f32 %v2032
      %v2225 = vcvt.s32.f32 %v2033
      %v2226 = vcvt.s32.f32 %v2034
      %v2227 = vcvt.s32.f32 %v2035
      %v2228 = vcvt.s32.f32 %v2036
      %v2229 = vcvt.s32.f32 %v2037
      %v2230 = vcvt.s32.f32 %v2038
      %v2231 = vcvt.s32.f32 %v2039
      %v2232 = vcvt.s32.f32 %v2040
      %v2233 = vcvt.s32.f32 %v2041
      %v2234 = vcvt.s32.f32 %v2042
      %v2235 = vcvt.s32.f32 %v2043
      %v2236 = vcvt.s32.f32 %v2044
      %v2237 = vcvt.s32.f32 %v2045
      %v2238 = vcvt.s32.f32 %v2046
      %v2239 = vcvt.s32.f32 %v2047
      %v2240 = vcvt.s32.f32 %v2048
      %v2241 = vcvt.s32.f32 %v2049
      %v2242 = vcvt.s32.f32 %v2050
      %v2243 = vcvt.s32.f32 %v2051
      %v2244 = vcvt.s32.f32 %v2052
      %v2245 = vcvt.s32.f32 %v2053
      %v2246 = vld [vmem:[#allocation2] sm:$0xff]
      %v2247 = vld [vmem:[#allocation2 + $0x8] sm:$0xff]
      %v2248 = vld [vmem:[#allocation2 + $0x10] sm:$0xff]
      %v2249 = vadd.f32 %v1670, %v1673
      %v2250 = vadd.f32 %v2249, %v1676
      %v2251 = vadd.f32 %v2250, %v1679
      %v2252 = vadd.f32 %v2251, %v1682
      %v2253 = vadd.f32 %v2252, %v1685
      %v2254 = vadd.f32 %v2253, %v1688
      %v2255 = vadd.f32 %v2254, %v1691
      %v2256 = vadd.f32 %v2255, %v1694
      %v2257 = vadd.f32 %v2256, %v1697
      %v2258 = vadd.f32 %v2257, %v1700
      %v2259 = vadd.f32 %v2258, %v1703
      %v2260 = vadd.f32 %v2259, %v1706
      %v2261 = vadd.f32 %v2260, %v1709
      %v2262 = vadd.f32 %v2261, %v1712
      %v2263 = vadd.f32 %v2262, %v1715
      %v2264 = vadd.f32 %v2263, %v1718
      %v2265 = vadd.f32 %v2264, %v1721
      %v2266 = vadd.f32 %v2265, %v1724
      %v2267 = vadd.f32 %v2266, %v1727
      %v2268 = vadd.f32 %v2267, %v1730
      %v2269 = vadd.f32 %v2268, %v1733
      %v2270 = vadd.f32 %v2269, %v1736
      %v2271 = vadd.f32 %v2270, %v1739
      %v2272 = vadd.f32 %v2271, %v1742
      %v2273 = vadd.f32 %v2272, %v1745
      %v2274 = vadd.f32 %v2273, %v1748
      %v2275 = vadd.f32 %v2274, %v1751
      %v2276 = vadd.f32 %v2275, %v1754
      %v2277 = vadd.f32 %v2276, %v1757
      %v2278 = vadd.f32 %v2277, %v1760
      %v2279 = vadd.f32 %v2278, %v1763
      %v2280 = vadd.f32 %v2279, %v1766
      %v2281 = vadd.f32 %v2280, %v1769
      %v2282 = vadd.f32 %v2281, %v1772
      %v2283 = vadd.f32 %v2282, %v1775
      %v2284 = vadd.f32 %v2283, %v1778
      %v2285 = vadd.f32 %v2284, %v1781
      %v2286 = vadd.f32 %v2285, %v1784
      %v2287 = vadd.f32 %v2286, %v1787
      %v2288 = vadd.f32 %v2287, %v1790
      %v2289 = vadd.f32 %v2288, %v1793
      %v2290 = vadd.f32 %v2289, %v1796
      %v2291 = vadd.f32 %v2290, %v1799
      %v2292 = vadd.f32 %v2291, %v1802
      %v2293 = vadd.f32 %v2292, %v1805
      %v2294 = vadd.f32 %v2293, %v1808
      %v2295 = vadd.f32 %v2294, %v1811
      %v2296 = vadd.f32 %v2295, %v1814
      %v2297 = vadd.f32 %v2296, %v1817
      %v2298 = vadd.f32 %v2297, %v1820
      %v2299 = vadd.f32 %v2298, %v1823
      %v2300 = vadd.f32 %v2299, %v1826
      %v2301 = vadd.f32 %v2300, %v1829
      %v2302 = vadd.f32 %v2301, %v1832
      %v2303 = vadd.f32 %v2302, %v1835
      %v2304 = vadd.f32 %v2303, %v1838
      %v2305 = vadd.f32 %v2304, %v1841
      %v2306 = vadd.f32 %v2305, %v1844
      %v2307 = vadd.f32 %v2306, %v1847
      %v2308 = vadd.f32 %v2307, %v1850
      %v2309 = vadd.f32 %v2308, %v1853
      %v2310 = vadd.f32 %v2309, %v1856
      %v2311 = vadd.f32 %v2310, %v1859
      %v2312 = vadd.f32 %v1671, %v1674
      %v2313 = vadd.f32 %v2312, %v1677
      %v2314 = vadd.f32 %v2313, %v1680
      %v2315 = vadd.f32 %v2314, %v1683
      %v2316 = vadd.f32 %v2315, %v1686
      %v2317 = vadd.f32 %v2316, %v1689
      %v2318 = vadd.f32 %v2317, %v1692
      %v2319 = vadd.f32 %v2318, %v1695
      %v2320 = vadd.f32 %v2319, %v1698
      %v2321 = vadd.f32 %v2320, %v1701
      %v2322 = vadd.f32 %v2321, %v1704
      %v2323 = vadd.f32 %v2322, %v1707
      %v2324 = vadd.f32 %v2323, %v1710
      %v2325 = vadd.f32 %v2324, %v1713
      %v2326 = vadd.f32 %v2325, %v1716
      %v2327 = vadd.f32 %v2326, %v1719
      %v2328 = vadd.f32 %v2327, %v1722
      %v2329 = vadd.f32 %v2328, %v1725
      %v2330 = vadd.f32 %v2329, %v1728
      %v2331 = vadd.f32 %v2330, %v1731
      %v2332 = vadd.f32 %v2331, %v1734
      %v2333 = vadd.f32 %v2332, %v1737
      %v2334 = vadd.f32 %v2333, %v1740
      %v2335 = vadd.f32 %v2334, %v1743
      %v2336 = vadd.f32 %v2335, %v1746
      %v2337 = vadd.f32 %v2336, %v1749
      %v2338 = vadd.f32 %v2337, %v1752
      %v2339 = vadd.f32 %v2338, %v1755
      %v2340 = vadd.f32 %v2339, %v1758
      %v2341 = vadd.f32 %v2340, %v1761
      %v2342 = vadd.f32 %v2341, %v1764
      %v2343 = vadd.f32 %v2342, %v1767
      %v2344 = vadd.f32 %v2343, %v1770
      %v2345 = vadd.f32 %v2344, %v1773
      %v2346 = vadd.f32 %v2345, %v1776
      %v2347 = vadd.f32 %v2346, %v1779
      %v2348 = vadd.f32 %v2347, %v1782
      %v2349 = vadd.f32 %v2348, %v1785
      %v2350 = vadd.f32 %v2349, %v1788
      %v2351 = vadd.f32 %v2350, %v1791
      %v2352 = vadd.f32 %v2351, %v1794
      %v2353 = vadd.f32 %v2352, %v1797
      %v2354 = vadd.f32 %v2353, %v1800
      %v2355 = vadd.f32 %v2354, %v1803
      %v2356 = vadd.f32 %v2355, %v1806
      %v2357 = vadd.f32 %v2356, %v1809
      %v2358 = vadd.f32 %v2357, %v1812
      %v2359 = vadd.f32 %v2358, %v1815
      %v2360 = vadd.f32 %v2359, %v1818
      %v2361 = vadd.f32 %v2360, %v1821
      %v2362 = vadd.f32 %v2361, %v1824
      %v2363 = vadd.f32 %v2362, %v1827
      %v2364 = vadd.f32 %v2363, %v1830
      %v2365 = vadd.f32 %v2364, %v1833
      %v2366 = vadd.f32 %v2365, %v1836
      %v2367 = vadd.f32 %v2366, %v1839
      %v2368 = vadd.f32 %v2367, %v1842
      %v2369 = vadd.f32 %v2368, %v1845
      %v2370 = vadd.f32 %v2369, %v1848
      %v2371 = vadd.f32 %v2370, %v1851
      %v2372 = vadd.f32 %v2371, %v1854
      %v2373 = vadd.f32 %v2372, %v1857
      %v2374 = vadd.f32 %v2373, %v1860
      %v2375 = vadd.f32 %v1672, %v1675
      %v2376 = vadd.f32 %v2375, %v1678
      %v2377 = vadd.f32 %v2376, %v1681
      %v2378 = vadd.f32 %v2377, %v1684
      %v2379 = vadd.f32 %v2378, %v1687
      %v2380 = vadd.f32 %v2379, %v1690
      %v2381 = vadd.f32 %v2380, %v1693
      %v2382 = vadd.f32 %v2381, %v1696
      %v2383 = vadd.f32 %v2382, %v1699
      %v2384 = vadd.f32 %v2383, %v1702
      %v2385 = vadd.f32 %v2384, %v1705
      %v2386 = vadd.f32 %v2385, %v1708
      %v2387 = vadd.f32 %v2386, %v1711
      %v2388 = vadd.f32 %v2387, %v1714
      %v2389 = vadd.f32 %v2388, %v1717
      %v2390 = vadd.f32 %v2389, %v1720
      %v2391 = vadd.f32 %v2390, %v1723
      %v2392 = vadd.f32 %v2391, %v1726
      %v2393 = vadd.f32 %v2392, %v1729
      %v2394 = vadd.f32 %v2393, %v1732
      %v2395 = vadd.f32 %v2394, %v1735
      %v2396 = vadd.f32 %v2395, %v1738
      %v2397 = vadd.f32 %v2396, %v1741
      %v2398 = vadd.f32 %v2397, %v1744
      %v2399 = vadd.f32 %v2398, %v1747
      %v2400 = vadd.f32 %v2399, %v1750
      %v2401 = vadd.f32 %v2400, %v1753
      %v2402 = vadd.f32 %v2401, %v1756
      %v2403 = vadd.f32 %v2402, %v1759
      %v2404 = vadd.f32 %v2403, %v1762
      %v2405 = vadd.f32 %v2404, %v1765
      %v2406 = vadd.f32 %v2405, %v1768
      %v2407 = vadd.f32 %v2406, %v1771
      %v2408 = vadd.f32 %v2407, %v1774
      %v2409 = vadd.f32 %v2408, %v1777
      %v2410 = vadd.f32 %v2409, %v1780
      %v2411 = vadd.f32 %v2410, %v1783
      %v2412 = vadd.f32 %v2411, %v1786
      %v2413 = vadd.f32 %v2412, %v1789
      %v2414 = vadd.f32 %v2413, %v1792
      %v2415 = vadd.f32 %v2414, %v1795
      %v2416 = vadd.f32 %v2415, %v1798
      %v2417 = vadd.f32 %v2416, %v1801
      %v2418 = vadd.f32 %v2417, %v1804
      %v2419 = vadd.f32 %v2418, %v1807
      %v2420 = vadd.f32 %v2419, %v1810
      %v2421 = vadd.f32 %v2420, %v1813
      %v2422 = vadd.f32 %v2421, %v1816
      %v2423 = vadd.f32 %v2422, %v1819
      %v2424 = vadd.f32 %v2423, %v1822
      %v2425 = vadd.f32 %v2424, %v1825
      %v2426 = vadd.f32 %v2425, %v1828
      %v2427 = vadd.f32 %v2426, %v1831
      %v2428 = vadd.f32 %v2427, %v1834
      %v2429 = vadd.f32 %v2428, %v1837
      %v2430 = vadd.f32 %v2429, %v1840
      %v2431 = vadd.f32 %v2430, %v1843
      %v2432 = vadd.f32 %v2431, %v1846
      %v2433 = vadd.f32 %v2432, %v1849
      %v2434 = vadd.f32 %v2433, %v1852
      %v2435 = vadd.f32 %v2434, %v1855
      %v2436 = vadd.f32 %v2435, %v1858
      %v2437 = vadd.f32 %v2436, %v1861
      %v2438 = vadd.f32 %v2246, %v2311
      %v2439 = vadd.f32 %v2247, %v2374
      %v2440 = vadd.f32 %v2248, %v2437
      %2441 = vst [vmem:[#allocation2] sm:$0xff] %v2438
      %2442 = vst [vmem:[#allocation2 + $0x8] sm:$0xff] %v2439
      %2443 = vst [vmem:[#allocation2 + $0x10] sm:$0xff] %v2440
      %v2444 = vld [vmem:[#allocation3] sm:$0xff]
      %v2445 = vld [vmem:[#allocation3 + $0x8] sm:$0xff]
      %v2446 = vld [vmem:[#allocation3 + $0x10] sm:$0xff]
      %v2447 = vadd.f32 %v2054, %v2057
      %v2448 = vadd.f32 %v2447, %v2060
      %v2449 = vadd.f32 %v2448, %v2063
      %v2450 = vadd.f32 %v2449, %v2066
      %v2451 = vadd.f32 %v2450, %v2069
      %v2452 = vadd.f32 %v2451, %v2072
      %v2453 = vadd.f32 %v2452, %v2075
      %v2454 = vadd.f32 %v2453, %v2078
      %v2455 = vadd.f32 %v2454, %v2081
      %v2456 = vadd.f32 %v2455, %v2084
      %v2457 = vadd.f32 %v2456, %v2087
      %v2458 = vadd.f32 %v2457, %v2090
      %v2459 = vadd.f32 %v2458, %v2093
      %v2460 = vadd.f32 %v2459, %v2096
      %v2461 = vadd.f32 %v2460, %v2099
      %v2462 = vadd.f32 %v2461, %v2102
      %v2463 = vadd.f32 %v2462, %v2105
      %v2464 = vadd.f32 %v2463, %v2108
      %v2465 = vadd.f32 %v2464, %v2111
      %v2466 = vadd.f32 %v2465, %v2114
      %v2467 = vadd.f32 %v2466, %v2117
      %v2468 = vadd.f32 %v2467, %v2120
      %v2469 = vadd.f32 %v2468, %v2123
      %v2470 = vadd.f32 %v2469, %v2126
      %v2471 = vadd.f32 %v2470, %v2129
      %v2472 = vadd.f32 %v2471, %v2132
      %v2473 = vadd.f32 %v2472, %v2135
      %v2474 = vadd.f32 %v2473, %v2138
      %v2475 = vadd.f32 %v2474, %v2141
      %v2476 = vadd.f32 %v2475, %v2144
      %v2477 = vadd.f32 %v2476, %v2147
      %v2478 = vadd.f32 %v2477, %v2150
      %v2479 = vadd.f32 %v2478, %v2153
      %v2480 = vadd.f32 %v2479, %v2156
      %v2481 = vadd.f32 %v2480, %v2159
      %v2482 = vadd.f32 %v2481, %v2162
      %v2483 = vadd.f32 %v2482, %v2165
      %v2484 = vadd.f32 %v2483, %v2168
      %v2485 = vadd.f32 %v2484, %v2171
      %v2486 = vadd.f32 %v2485, %v2174
      %v2487 = vadd.f32 %v2486, %v2177
      %v2488 = vadd.f32 %v2487, %v2180
      %v2489 = vadd.f32 %v2488, %v2183
      %v2490 = vadd.f32 %v2489, %v2186
      %v2491 = vadd.f32 %v2490, %v2189
      %v2492 = vadd.f32 %v2491, %v2192
      %v2493 = vadd.f32 %v2492, %v2195
      %v2494 = vadd.f32 %v2493, %v2198
      %v2495 = vadd.f32 %v2494, %v2201
      %v2496 = vadd.f32 %v2495, %v2204
      %v2497 = vadd.f32 %v2496, %v2207
      %v2498 = vadd.f32 %v2497, %v2210
      %v2499 = vadd.f32 %v2498, %v2213
      %v2500 = vadd.f32 %v2499, %v2216
      %v2501 = vadd.f32 %v2500, %v2219
      %v2502 = vadd.f32 %v2501, %v2222
      %v2503 = vadd.f32 %v2502, %v2225
      %v2504 = vadd.f32 %v2503, %v2228
      %v2505 = vadd.f32 %v2504, %v2231
      %v2506 = vadd.f32 %v2505, %v2234
      %v2507 = vadd.f32 %v2506, %v2237
      %v2508 = vadd.f32 %v2507, %v2240
      %v2509 = vadd.f32 %v2508, %v2243
      %v2510 = vadd.f32 %v2055, %v2058
      %v2511 = vadd.f32 %v2510, %v2061
      %v2512 = vadd.f32 %v2511, %v2064
      %v2513 = vadd.f32 %v2512, %v2067
      %v2514 = vadd.f32 %v2513, %v2070
      %v2515 = vadd.f32 %v2514, %v2073
      %v2516 = vadd.f32 %v2515, %v2076
      %v2517 = vadd.f32 %v2516, %v2079
      %v2518 = vadd.f32 %v2517, %v2082
      %v2519 = vadd.f32 %v2518, %v2085
      %v2520 = vadd.f32 %v2519, %v2088
      %v2521 = vadd.f32 %v2520, %v2091
      %v2522 = vadd.f32 %v2521, %v2094
      %v2523 = vadd.f32 %v2522, %v2097
      %v2524 = vadd.f32 %v2523, %v2100
      %v2525 = vadd.f32 %v2524, %v2103
      %v2526 = vadd.f32 %v2525, %v2106
      %v2527 = vadd.f32 %v2526, %v2109
      %v2528 = vadd.f32 %v2527, %v2112
      %v2529 = vadd.f32 %v2528, %v2115
      %v2530 = vadd.f32 %v2529, %v2118
      %v2531 = vadd.f32 %v2530, %v2121
      %v2532 = vadd.f32 %v2531, %v2124
      %v2533 = vadd.f32 %v2532, %v2127
      %v2534 = vadd.f32 %v2533, %v2130
      %v2535 = vadd.f32 %v2534, %v2133
      %v2536 = vadd.f32 %v2535, %v2136
      %v2537 = vadd.f32 %v2536, %v2139
      %v2538 = vadd.f32 %v2537, %v2142
      %v2539 = vadd.f32 %v2538, %v2145
      %v2540 = vadd.f32 %v2539, %v2148
      %v2541 = vadd.f32 %v2540, %v2151
      %v2542 = vadd.f32 %v2541, %v2154
      %v2543 = vadd.f32 %v2542, %v2157
      %v2544 = vadd.f32 %v2543, %v2160
      %v2545 = vadd.f32 %v2544, %v2163
      %v2546 = vadd.f32 %v2545, %v2166
      %v2547 = vadd.f32 %v2546, %v2169
      %v2548 = vadd.f32 %v2547, %v2172
      %v2549 = vadd.f32 %v2548, %v2175
      %v2550 = vadd.f32 %v2549, %v2178
      %v2551 = vadd.f32 %v2550, %v2181
      %v2552 = vadd.f32 %v2551, %v2184
      %v2553 = vadd.f32 %v2552, %v2187
      %v2554 = vadd.f32 %v2553, %v2190
      %v2555 = vadd.f32 %v2554, %v2193
      %v2556 = vadd.f32 %v2555, %v2196
      %v2557 = vadd.f32 %v2556, %v2199
      %v2558 = vadd.f32 %v2557, %v2202
      %v2559 = vadd.f32 %v2558, %v2205
      %v2560 = vadd.f32 %v2559, %v2208
      %v2561 = vadd.f32 %v2560, %v2211
      %v2562 = vadd.f32 %v2561, %v2214
      %v2563 = vadd.f32 %v2562, %v2217
      %v2564 = vadd.f32 %v2563, %v2220
      %v2565 = vadd.f32 %v2564, %v2223
      %v2566 = vadd.f32 %v2565, %v2226
      %v2567 = vadd.f32 %v2566, %v2229
      %v2568 = vadd.f32 %v2567, %v2232
      %v2569 = vadd.f32 %v2568, %v2235
      %v2570 = vadd.f32 %v2569, %v2238
      %v2571 = vadd.f32 %v2570, %v2241
      %v2572 = vadd.f32 %v2571, %v2244
      %v2573 = vadd.f32 %v2056, %v2059
      %v2574 = vadd.f32 %v2573, %v2062
      %v2575 = vadd.f32 %v2574, %v2065
      %v2576 = vadd.f32 %v2575, %v2068
      %v2577 = vadd.f32 %v2576, %v2071
      %v2578 = vadd.f32 %v2577, %v2074
      %v2579 = vadd.f32 %v2578, %v2077
      %v2580 = vadd.f32 %v2579, %v2080
      %v2581 = vadd.f32 %v2580, %v2083
      %v2582 = vadd.f32 %v2581, %v2086
      %v2583 = vadd.f32 %v2582, %v2089
      %v2584 = vadd.f32 %v2583, %v2092
      %v2585 = vadd.f32 %v2584, %v2095
      %v2586 = vadd.f32 %v2585, %v2098
      %v2587 = vadd.f32 %v2586, %v2101
      %v2588 = vadd.f32 %v2587, %v2104
      %v2589 = vadd.f32 %v2588, %v2107
      %v2590 = vadd.f32 %v2589, %v2110
      %v2591 = vadd.f32 %v2590, %v2113
      %v2592 = vadd.f32 %v2591, %v2116
      %v2593 = vadd.f32 %v2592, %v2119
      %v2594 = vadd.f32 %v2593, %v2122
      %v2595 = vadd.f32 %v2594, %v2125
      %v2596 = vadd.f32 %v2595, %v2128
      %v2597 = vadd.f32 %v2596, %v2131
      %v2598 = vadd.f32 %v2597, %v2134
      %v2599 = vadd.f32 %v2598, %v2137
      %v2600 = vadd.f32 %v2599, %v2140
      %v2601 = vadd.f32 %v2600, %v2143
      %v2602 = vadd.f32 %v2601, %v2146
      %v2603 = vadd.f32 %v2602, %v2149
      %v2604 = vadd.f32 %v2603, %v2152
      %v2605 = vadd.f32 %v2604, %v2155
      %v2606 = vadd.f32 %v2605, %v2158
      %v2607 = vadd.f32 %v2606, %v2161
      %v2608 = vadd.f32 %v2607, %v2164
      %v2609 = vadd.f32 %v2608, %v2167
      %v2610 = vadd.f32 %v2609, %v2170
      %v2611 = vadd.f32 %v2610, %v2173
      %v2612 = vadd.f32 %v2611, %v2176
      %v2613 = vadd.f32 %v2612, %v2179
      %v2614 = vadd.f32 %v2613, %v2182
      %v2615 = vadd.f32 %v2614, %v2185
      %v2616 = vadd.f32 %v2615, %v2188
      %v2617 = vadd.f32 %v2616, %v2191
      %v2618 = vadd.f32 %v2617, %v2194
      %v2619 = vadd.f32 %v2618, %v2197
      %v2620 = vadd.f32 %v2619, %v2200
      %v2621 = vadd.f32 %v2620, %v2203
      %v2622 = vadd.f32 %v2621, %v2206
      %v2623 = vadd.f32 %v2622, %v2209
      %v2624 = vadd.f32 %v2623, %v2212
      %v2625 = vadd.f32 %v2624, %v2215
      %v2626 = vadd.f32 %v2625, %v2218
      %v2627 = vadd.f32 %v2626, %v2221
      %v2628 = vadd.f32 %v2627, %v2224
      %v2629 = vadd.f32 %v2628, %v2227
      %v2630 = vadd.f32 %v2629, %v2230
      %v2631 = vadd.f32 %v2630, %v2233
      %v2632 = vadd.f32 %v2631, %v2236
      %v2633 = vadd.f32 %v2632, %v2239
      %v2634 = vadd.f32 %v2633, %v2242
      %v2635 = vadd.f32 %v2634, %v2245
      %v2636 = vadd.f32 %v2444, %v2509
      %v2637 = vadd.f32 %v2445, %v2572
      %v2638 = vadd.f32 %v2446, %v2635
      %2639 = vst [vmem:[#allocation3] sm:$0xff] %v2636
      %2640 = vst [vmem:[#allocation3 + $0x8] sm:$0xff] %v2637
      %2641 = vst [vmem:[#allocation3 + $0x10] sm:$0xff] %v2638
      %p2642 = scmp.eq.s32.totalorder %s19, 1
      // Predicated region
      $region37: #{_per_label_loss_pallas.1} parent=31 // pred_check
        %p2643 = pneg %p2642
      $region38: #{_per_label_loss_pallas.1} parent=31 // pred_check_branch
        %2645 = sbr.rel (%p2643) target = $region40
      $region39: #{_per_label_loss_pallas.1} parent=31 // pred_region
        %v2646 = vld [vmem:[#allocation2] sm:$0xff]
        %v2647 = vld [vmem:[#allocation2 + $0x8] sm:$0xff]
        %v2648 = vld [vmem:[#allocation2 + $0x10] sm:$0xff]
        %v2649 = vrot.slane %v2646, 4
        %v2650 = vadd.f32 %v2646, %v2649
        %v2651 = vrot.slane %v2650, 2
        %v2652 = vadd.f32 %v2650, %v2651
        %v2653 = vrot.slane %v2652, 1
        %v2654 = vadd.f32 %v2652, %v2653
        %v2655 = vrot.slane %v2647, 4
        %v2656 = vadd.f32 %v2647, %v2655
        %v2657 = vrot.slane %v2656, 2
        %v2658 = vadd.f32 %v2656, %v2657
        %v2659 = vrot.slane %v2658, 1
        %v2660 = vadd.f32 %v2658, %v2659
        %v2661 = vrot.slane %v2648, 4
        %v2662 = vadd.f32 %v2648, %v2661
        %v2663 = vrot.slane %v2662, 2
        %v2664 = vadd.f32 %v2662, %v2663
        %v2665 = vrot.slane %v2664, 1
        %v2666 = vadd.f32 %v2664, %v2665
        %v2667 = vld [vmem:[#allocation3] sm:$0xff]
        %v2668 = vld [vmem:[#allocation3 + $0x8] sm:$0xff]
        %v2669 = vld [vmem:[#allocation3 + $0x10] sm:$0xff]
        %v2670 = vrot.slane %v2667, 4
        %v2671 = vadd.f32 %v2667, %v2670
        %v2672 = vrot.slane %v2671, 2
        %v2673 = vadd.f32 %v2671, %v2672
        %v2674 = vrot.slane %v2673, 1
        %v2675 = vadd.f32 %v2673, %v2674
        %v2676 = vrot.slane %v2668, 4
        %v2677 = vadd.f32 %v2668, %v2676
        %v2678 = vrot.slane %v2677, 2
        %v2679 = vadd.f32 %v2677, %v2678
        %v2680 = vrot.slane %v2679, 1
        %v2681 = vadd.f32 %v2679, %v2680
        %v2682 = vrot.slane %v2669, 4
        %v2683 = vadd.f32 %v2669, %v2682
        %v2684 = vrot.slane %v2683, 2
        %v2685 = vadd.f32 %v2683, %v2684
        %v2686 = vrot.slane %v2685, 1
        %v2687 = vadd.f32 %v2685, %v2686
        %v2688 = vld [vmem:[%s306] sm:$0x7]
        %v2692 = vrot.slane %v2660, 7
        %v2693 = vrot.slane %v2666, 6
        %vm2694 = vcmask 1040384
        %v2695 = vsel %vm2694, %v2654, %v2692
        %vm2696 = vcmask 1041408
        %v2697 = vsel %vm2696, %v2695, %v2693
        %v2699 = vmul.f32 %v2688, %v2697
        %v2700 = vrcp.pop %v2675
        %v2701 = vmul.f32 %v2675, %v2700
        %v2702 = vsub.f32 1.0, %v2701
        %v2703 = vmul.f32 %v2700, %v2702
        %v2704 = vadd.f32 %v2700, %v2703
        %vm2705 = vweird.f32 %v2675
        %vm2706 = vweird.f32 %v2700
        %vm2707 = vmor %vm2705, %vm2706
        %v2708 = vsel %vm2707, %v2700, %v2704
        %v2709 = vand.u32 2147483647, %v2675
        %vm2710 = vcmp.eq.f32.partialorder %v2709, 8.507059e+37
        %v2711 = vand.u32 %v2675, 2147483648
        %v2712 = vor.u32 1.1754944e-38, %v2711
        %v2713 = vsel %vm2710, %v2712, %v2708
        %v2714 = vrcp.pop %v2681
        %v2715 = vmul.f32 %v2681, %v2714
        %v2716 = vsub.f32 1.0, %v2715
        %v2717 = vmul.f32 %v2714, %v2716
        %v2718 = vadd.f32 %v2714, %v2717
        %vm2719 = vweird.f32 %v2681
        %vm2720 = vweird.f32 %v2714
        %vm2721 = vmor %vm2719, %vm2720
        %v2722 = vsel %vm2721, %v2714, %v2718
        %v2723 = vand.u32 2147483647, %v2681
        %vm2724 = vcmp.eq.f32.partialorder %v2723, 8.507059e+37
        %v2725 = vand.u32 %v2681, 2147483648
        %v2726 = vor.u32 1.1754944e-38, %v2725
        %v2727 = vsel %vm2724, %v2726, %v2722
        %v2728 = vrcp.pop %v2687
        %v2729 = vmul.f32 %v2687, %v2728
        %v2730 = vsub.f32 1.0, %v2729
        %v2731 = vmul.f32 %v2728, %v2730
        %v2732 = vadd.f32 %v2728, %v2731
        %vm2733 = vweird.f32 %v2687
        %vm2734 = vweird.f32 %v2728
        %vm2735 = vmor %vm2733, %vm2734
        %v2736 = vsel %vm2735, %v2728, %v2732
        %v2737 = vand.u32 2147483647, %v2687
        %vm2738 = vcmp.eq.f32.partialorder %v2737, 8.507059e+37
        %v2739 = vand.u32 %v2687, 2147483648
        %v2740 = vor.u32 1.1754944e-38, %v2739
        %v2741 = vsel %vm2738, %v2740, %v2736
        %v2745 = vrot.slane %v2727, 7
        %v2746 = vrot.slane %v2741, 6
        %v2747 = vsel %vm2694, %v2713, %v2745
        %v2748 = vsel %vm2696, %v2747, %v2746
        %v2750 = vmul.f32 %v2699, %v2748
        %v2751 = vlaneseq
        %vm2752 = vcmp.ge.s32.totalorder %v2751, 0
        %vm2753 = vcmp.lt.s32.totalorder %v2751, 384
        %vm2754 = vmand %vm2752, %vm2753
        %2755 = vst.msk [vmem:[%s311] sm:$0x7] %vm2754, %v2750
      $region40: #{_per_label_loss_pallas.1} parent=31 // pred_fallthru
        _
      %s2756 = smul.u32 3, %s18
      %p2757 = scmp.lt.s32.totalorder %s2756, 2
      %s2758 = scalar_select %p2757, %s2756, 2
      %s2759 = scalar_lea.vmem %s3, %s2758
      // Predicated region
      $region41: #{_per_label_loss_pallas.1} parent=31 // pred_check
        %p2760 = pneg %p126
      $region42: #{_per_label_loss_pallas.1} parent=31 // pred_check_branch
        %2762 = sbr.rel (%p2760) target = $region44
      $region43: #{_per_label_loss_pallas.1} parent=31 // pred_region
        %s2763 = smul.u32 3, %s18
      $region44: #{_per_label_loss_pallas.1} parent=31 // pred_fallthru
        _
      // Predicated region
      $region45: #{_per_label_loss_pallas.1} parent=31 // pred_check
        %p2764 = pneg %p126
      $region46: #{_per_label_loss_pallas.1} parent=31 // pred_check_branch
        %2766 = sbr.rel (%p2764) target = $region48
      $region47: #{_per_label_loss_pallas.1} parent=31 // pred_region
        %s2767 = smul.u32 3, %s18
        %p2768 = scmp.lt.s32.totalorder %s2767, 2
        %s2769 = scalar_select %p2768, %s2767, 2
        %s2770 = scalar_lea.vmem %s3, %s2769
      $region48: #{_per_label_loss_pallas.1} parent=31 // pred_fallthru
        _
    $region32: #{_per_label_loss_pallas.1} parent=5 // pred_fallthru
      _
    %p2771 = scmp.le.s32.totalorder 2, %s9
    // Predicated region
    $region49: #{_per_label_loss_pallas.1} parent=5 // pred_check
      %p2772 = pneg %p2771
    $region50: #{_per_label_loss_pallas.1} parent=5 // pred_check_branch
      %2774 = sbr.rel (%p2772) target = $region52
    $region51: #{_per_label_loss_pallas.1} parent=5 // pred_region
      %s2775 = ssub.s32 %s9, 2
    $region52: #{_per_label_loss_pallas.1} parent=5 // pred_fallthru
      _
  $region6: #{_per_label_loss_pallas.1} parent=0 // loop_footer
    %s13 = sadd.s32 1, %s9
  $region7: #{_per_label_loss_pallas.1} parent=0 // loop_footer_branch
    %8 = sbr.rel target = $region3
  $region8: #{_per_label_loss_pallas.1} parent=0 // loop_exit
    _

</llo_original>
